<compile_context>
chip_gen: v5e
topology: v5e:2x2
jax: 0.10.0
libtpu: 0.0.40
codegen_flags: <defaults>
</compile_context>

<pallas_src>
from functools import partial

import numpy as np
import jax
import jax.numpy as jnp
from jax import lax
from jax.experimental import pallas as pl
from jax.experimental.pallas import tpu as pltpu


def _temporal_attention_kernel(x_ref, wqkv_ref, wproj_ref, bproj_ref, o_ref,
                               *, num_heads, approx_recip):
    # x_ref:     (Bb, T, C)   block of batch elements (compute dtype)
    # wqkv_ref:  (C, 3C)      fused qkv weight; q columns pre-scaled by temperature
    # wproj_ref: (C, C)       output-projection weight
    # bproj_ref: (1, C)       output-projection bias (f32)
    # o_ref:     (Bb, T, C)
    Bb, T, C = x_ref.shape
    H = num_heads
    Dh = C // H
    cdt = x_ref.dtype                              # MXU input dtype (f32 or bf16)

    xf = x_ref[...].reshape(Bb * T, C)             # leading-dim merge only

    # (1) Fused QKV projection: single lane-dense (Bb*T, C) @ (C, 3C) MXU pass.
    qkv = jnp.dot(xf, wqkv_ref[...],
                  preferred_element_type=jnp.float32).astype(cdt)   # (Bb*T, 3C)

    # (2) Head split: static lane slices + leading-axis stack (no minor-dim
    #     reshape), giving (Bb*H, T, Dh) for batched attention.
    def split_heads(start):
        cols = [qkv[:, start + h * Dh: start + (h + 1) * Dh].reshape(Bb, T, Dh)
                for h in range(H)]
        return jnp.stack(cols, axis=1).reshape(Bb * H, T, Dh)

    q = split_heads(0)          # temperature already folded into these columns
    k = split_heads(C)
    v = split_heads(2 * C)

    # (3) Attention per (batch, head): contract Dh directly so no transposed
    #     copy of k is materialized.  Softmax math stays f32.
    scores = lax.dot_general(q, k, (((2,), (2,)), ((0,), (0,))),
                             preferred_element_type=jnp.float32)     # (Bb*H, T, T)
    scores = scores - jnp.max(scores, axis=-1, keepdims=True)
    p = jnp.exp(scores)
    denom = jnp.sum(p, axis=-1, keepdims=True)
    # EUP approximate reciprocal only on the bf16 fast path (exact on f32 path).
    p = p * pl.reciprocal(denom, approx=approx_recip)

    ctx = lax.dot_general(p.astype(cdt), v, (((2,), (1,)), ((0,), (0,))),
                          preferred_element_type=jnp.float32)        # (Bb*H, T, Dh)
    ctx = ctx.astype(cdt).reshape(Bb, H, T, Dh)

    # (4) Merge heads back to lane-dense (Bb*T, C) and run ONE K=C output
    #     projection matmul; the head accumulation happens inside the MXU.
    ctxm = jnp.concatenate([ctx[:, h] for h in range(H)], axis=-1)   # (Bb, T, C)
    y = jnp.dot(ctxm.reshape(Bb * T, C), wproj_ref[...],
                preferred_element_type=jnp.float32)                  # (Bb*T, C) f32
    y = y + bproj_ref[...]
    o_ref[...] = y.reshape(Bb, T, C).astype(o_ref.dtype)


def _default_vmem_limit_bytes():
    # Derive the scoped-VMEM request from the chip (v5e/v6e: 128 MiB physical,
    # v7x: 64 MiB) instead of hard-coding; conservative fallback if unavailable.
    try:
        cap = int(pltpu.get_tpu_info().vmem_capacity_bytes)
    except Exception:
        cap = 64 * 1024 * 1024
    return int(min(cap // 2, 64 * 1024 * 1024))


def temporal_attention(x, w_qkv, w_proj, b_proj, temperature, num_heads, *,
                       compute_dtype=jnp.float32, batch_block=None):
    """Fused TemporalAttention forward.  x: (B, T, C).  Returns (B, T, C)."""
    B, T, C = x.shape
    H = num_heads
    assert C % H == 0, "channels must divide evenly across heads"
    Dh = C // H
    out_dtype = x.dtype

    # Block more work per grid step (review item 5): pick as many batch elements
    # per step as keep the x/out tile under ~2 MiB, and keep the grid exact.
    if batch_block is None:
        per_b_bytes = T * C * np.dtype(compute_dtype).itemsize
        batch_block = max(1, min(B, (2 * 1024 * 1024) // max(per_b_bytes, 1)))
        while B % batch_block:
            batch_block -= 1
    Bb = int(batch_block)
    if B % Bb != 0:
        raise ValueError(f"batch_block={Bb} must divide B={B}")

    # Fold the per-head temperature into the q columns of the FUSED qkv weight
    # (output-feature order of w_qkv is [3, H, Dh], so q-head-h columns are
    # [h*Dh, (h+1)*Dh)).  Exact algebraic rewrite of "scores * temperature".
    t = temperature.reshape(H).astype(w_qkv.dtype)
    scale = jnp.concatenate([jnp.repeat(t, Dh),
                             jnp.ones((2 * C,), dtype=w_qkv.dtype)])   # (3C,)
    wqkv_s = (w_qkv * scale[None, :]).astype(compute_dtype)            # (C, 3C)
    wproj_c = w_proj.astype(compute_dtype)                             # (C, C)
    b2 = b_proj.reshape(1, C).astype(jnp.float32)
    x_c = x.astype(compute_dtype)

    kernel = partial(
        _temporal_attention_kernel,
        num_heads=H,
        approx_recip=bool(np.dtype(compute_dtype) == np.dtype(jnp.bfloat16)),
    )

    # Grid-invariant operands are single-buffered (their index_map is constant,
    # so double-buffering only doubles VMEM footprint).
    invariant = pl.Buffered(1)

    return pl.pallas_call(
        kernel,
        out_shape=jax.ShapeDtypeStruct((B, T, C), out_dtype),
        grid_spec=pltpu.PrefetchScalarGridSpec(
            num_scalar_prefetch=0,
            grid=(B // Bb,),
            in_specs=[
                pl.BlockSpec((Bb, T, C), lambda b: (b, 0, 0)),               # x
                pl.BlockSpec((C, 3 * C), lambda b: (0, 0),
                             pipeline_mode=invariant),                       # w_qkv
                pl.BlockSpec((C, C), lambda b: (0, 0),
                             pipeline_mode=invariant),                       # w_proj
                pl.BlockSpec((1, C), lambda b: (0, 0),
                             pipeline_mode=invariant),                       # bias
            ],
            out_specs=pl.BlockSpec((Bb, T, C), lambda b: (b, 0, 0)),
        ),
        compiler_params=pltpu.CompilerParams(
            dimension_semantics=("parallel",),
            vmem_limit_bytes=_default_vmem_limit_bytes(),
        ),
    )(x_c, wqkv_s, wproj_c, b2)


def temporal_attention_ref(x, w_qkv, w_proj, b_proj, temperature, num_heads):
    """Pure-JAX reference mirroring the PyTorch forward exactly."""
    B, T, C = x.shape
    H = num_heads
    Dh = C // H
    qkv = x @ w_qkv                                             # (B, T, 3C)
    qkv = qkv.reshape(B, T, 3, H, Dh).transpose(2, 0, 3, 1, 4)  # (3, B, H, T, Dh)
    q, k, v = qkv[0], qkv[1], qkv[2]
    attn = jnp.einsum("bhtd,bhsd->bhts", q, k) * temperature.reshape(1, H, 1, 1)
    attn = jax.nn.softmax(attn, axis=-1)
    out = jnp.einsum("bhts,bhsd->bhtd", attn, v)                # (B, H, T, Dh)
    out = out.transpose(0, 2, 1, 3).reshape(B, T, C)
    return out @ w_proj + b_proj


if __name__ == "__main__":
    # head_dim = 16; C = 128 keeps all merged activations / outputs lane-dense.
    B, T, C, H = 2, 16, 128, 8

    key = jax.random.PRNGKey(0)
    kx, k1, k2, k3, k4 = jax.random.split(key, 5)

    x = jax.random.normal(kx, (B, T, C), dtype=jnp.float32)
    w_qkv = jax.random.normal(k1, (C, 3 * C), dtype=jnp.float32) * 0.05
    w_proj = jax.random.normal(k2, (C, C), dtype=jnp.float32) * 0.05
    b_proj = jax.random.normal(k3, (C,), dtype=jnp.float32) * 0.05
    # PyTorch inits temperature to ones(num_heads,1,1); perturb deterministically
    # so the per-head scaling is actually exercised.
    temperature = 1.0 + 0.1 * jax.random.normal(k4, (H,), dtype=jnp.float32)

    ref = temporal_attention_ref(x, w_qkv, w_proj, b_proj, temperature, H)

    # f32 MXU-input path (accumulation f32; tolerance allows for generations /
    # compiler defaults where f32 contractions run as reduced-precision MXU
    # passes — with full f32 passes the observed error is ~1e-5).
    out_f32 = jax.block_until_ready(
        temporal_attention(x, w_qkv, w_proj, b_proj, temperature, H,
                           compute_dtype=jnp.float32))
    np.testing.assert_allclose(np.asarray(out_f32), np.asarray(ref),
                               rtol=2e-2, atol=2e-2)

    # bf16 MXU-input fast path (f32 accumulation) — valid on v5e/v6e/v7x.
    out_bf16 = jax.block_until_ready(
        temporal_attention(x, w_qkv, w_proj, b_proj, temperature, H,
                           compute_dtype=jnp.bfloat16))
    np.testing.assert_allclose(np.asarray(out_bf16), np.asarray(ref),
                               rtol=6e-2, atol=6e-2)

    print("KERNEL_OK")
</pallas_src>

<mosaic_0001>
module attributes {stable_mosaic.version = 11 : i64} {
  func.func @_temporal_attention_kernel(%arg0: i32, %arg1: memref<2x16x128xf32, #tpu.memory_space<vmem>>, %arg2: memref<128x384xf32, #tpu.memory_space<vmem>>, %arg3: memref<128x128xf32, #tpu.memory_space<vmem>>, %arg4: memref<1x128xf32, #tpu.memory_space<vmem>>, %arg5: memref<2x16x128xf32, #tpu.memory_space<vmem>>) attributes {dimension_semantics = [#tpu.dimension_semantics<parallel>], iteration_bounds = array<i64: 1>, scalar_prefetch = 0 : i64, scratch_operands = 0 : i64, tpu.core_type = #tpu.core_type<tc>, window_params = [{transform_indices = @transform_0, window_bounds = array<i64: 2, 16, 128>}, {pipeline_mode = #tpu.pipeline_mode<synchronous>, transform_indices = @transform_1, window_bounds = array<i64: 128, 384>}, {pipeline_mode = #tpu.pipeline_mode<synchronous>, transform_indices = @transform_2, window_bounds = array<i64: 128, 128>}, {pipeline_mode = #tpu.pipeline_mode<synchronous>, transform_indices = @transform_3, window_bounds = array<i64: 1, 128>}, {transform_indices = @transform_4, window_bounds = array<i64: 2, 16, 128>}]} {
    %c0 = arith.constant 0 : index
    %c0_0 = arith.constant 0 : index
    %c0_1 = arith.constant 0 : index
    %0 = vector.load %arg1[%c0, %c0_0, %c0_1] : memref<2x16x128xf32, #tpu.memory_space<vmem>>, vector<2x16x128xf32>
    %1 = vector.shape_cast %0 : vector<2x16x128xf32> to vector<32x128xf32>
    %c0_2 = arith.constant 0 : index
    %c0_3 = arith.constant 0 : index
    %2 = vector.load %arg2[%c0_2, %c0_3] : memref<128x384xf32, #tpu.memory_space<vmem>>, vector<128x384xf32>
    %cst = arith.constant dense<0.000000e+00> : vector<32x384xf32>
    %3 = tpu.matmul %1, %2, %cst {dimension_numbers = #tpu.dot_dimension_numbers<[1], [0], [0], [1], [0, 0, 1, 1], [], []>} : vector<32x128xf32>, vector<128x384xf32>, vector<32x384xf32> -> vector<32x384xf32>
    %4 = vector.extract_strided_slice %3 {offsets = [0, 0], sizes = [32, 16], strides = [1, 1]} : vector<32x384xf32> to vector<32x16xf32>
    %5 = vector.shape_cast %4 : vector<32x16xf32> to vector<2x16x16xf32>
    %6 = vector.extract_strided_slice %3 {offsets = [0, 16], sizes = [32, 16], strides = [1, 1]} : vector<32x384xf32> to vector<32x16xf32>
    %7 = vector.shape_cast %6 : vector<32x16xf32> to vector<2x16x16xf32>
    %8 = vector.extract_strided_slice %3 {offsets = [0, 32], sizes = [32, 16], strides = [1, 1]} : vector<32x384xf32> to vector<32x16xf32>
    %9 = vector.shape_cast %8 : vector<32x16xf32> to vector<2x16x16xf32>
    %10 = vector.extract_strided_slice %3 {offsets = [0, 48], sizes = [32, 16], strides = [1, 1]} : vector<32x384xf32> to vector<32x16xf32>
    %11 = vector.shape_cast %10 : vector<32x16xf32> to vector<2x16x16xf32>
    %12 = vector.extract_strided_slice %3 {offsets = [0, 64], sizes = [32, 16], strides = [1, 1]} : vector<32x384xf32> to vector<32x16xf32>
    %13 = vector.shape_cast %12 : vector<32x16xf32> to vector<2x16x16xf32>
    %14 = vector.extract_strided_slice %3 {offsets = [0, 80], sizes = [32, 16], strides = [1, 1]} : vector<32x384xf32> to vector<32x16xf32>
    %15 = vector.shape_cast %14 : vector<32x16xf32> to vector<2x16x16xf32>
    %16 = vector.extract_strided_slice %3 {offsets = [0, 96], sizes = [32, 16], strides = [1, 1]} : vector<32x384xf32> to vector<32x16xf32>
    %17 = vector.shape_cast %16 : vector<32x16xf32> to vector<2x16x16xf32>
    %18 = vector.extract_strided_slice %3 {offsets = [0, 112], sizes = [32, 16], strides = [1, 1]} : vector<32x384xf32> to vector<32x16xf32>
    %19 = vector.shape_cast %18 : vector<32x16xf32> to vector<2x16x16xf32>
    %20 = vector.shape_cast %5 : vector<2x16x16xf32> to vector<2x1x16x16xf32>
    %21 = vector.shape_cast %7 : vector<2x16x16xf32> to vector<2x1x16x16xf32>
    %22 = vector.shape_cast %9 : vector<2x16x16xf32> to vector<2x1x16x16xf32>
    %23 = vector.shape_cast %11 : vector<2x16x16xf32> to vector<2x1x16x16xf32>
    %24 = vector.shape_cast %13 : vector<2x16x16xf32> to vector<2x1x16x16xf32>
    %25 = vector.shape_cast %15 : vector<2x16x16xf32> to vector<2x1x16x16xf32>
    %26 = vector.shape_cast %17 : vector<2x16x16xf32> to vector<2x1x16x16xf32>
    %27 = vector.shape_cast %19 : vector<2x16x16xf32> to vector<2x1x16x16xf32>
    %28 = tpu.concatenate %20, %21, %22, %23, %24, %25, %26, %27 in 1 : vector<2x1x16x16xf32>, vector<2x1x16x16xf32>, vector<2x1x16x16xf32>, vector<2x1x16x16xf32>, vector<2x1x16x16xf32>, vector<2x1x16x16xf32>, vector<2x1x16x16xf32>, vector<2x1x16x16xf32> -> vector<2x8x16x16xf32>
    %29 = vector.shape_cast %28 : vector<2x8x16x16xf32> to vector<16x16x16xf32>
    %30 = vector.extract_strided_slice %3 {offsets = [0, 128], sizes = [32, 16], strides = [1, 1]} : vector<32x384xf32> to vector<32x16xf32>
    %31 = vector.shape_cast %30 : vector<32x16xf32> to vector<2x16x16xf32>
    %32 = vector.extract_strided_slice %3 {offsets = [0, 144], sizes = [32, 16], strides = [1, 1]} : vector<32x384xf32> to vector<32x16xf32>
    %33 = vector.shape_cast %32 : vector<32x16xf32> to vector<2x16x16xf32>
    %34 = vector.extract_strided_slice %3 {offsets = [0, 160], sizes = [32, 16], strides = [1, 1]} : vector<32x384xf32> to vector<32x16xf32>
    %35 = vector.shape_cast %34 : vector<32x16xf32> to vector<2x16x16xf32>
    %36 = vector.extract_strided_slice %3 {offsets = [0, 176], sizes = [32, 16], strides = [1, 1]} : vector<32x384xf32> to vector<32x16xf32>
    %37 = vector.shape_cast %36 : vector<32x16xf32> to vector<2x16x16xf32>
    %38 = vector.extract_strided_slice %3 {offsets = [0, 192], sizes = [32, 16], strides = [1, 1]} : vector<32x384xf32> to vector<32x16xf32>
    %39 = vector.shape_cast %38 : vector<32x16xf32> to vector<2x16x16xf32>
    %40 = vector.extract_strided_slice %3 {offsets = [0, 208], sizes = [32, 16], strides = [1, 1]} : vector<32x384xf32> to vector<32x16xf32>
    %41 = vector.shape_cast %40 : vector<32x16xf32> to vector<2x16x16xf32>
    %42 = vector.extract_strided_slice %3 {offsets = [0, 224], sizes = [32, 16], strides = [1, 1]} : vector<32x384xf32> to vector<32x16xf32>
    %43 = vector.shape_cast %42 : vector<32x16xf32> to vector<2x16x16xf32>
    %44 = vector.extract_strided_slice %3 {offsets = [0, 240], sizes = [32, 16], strides = [1, 1]} : vector<32x384xf32> to vector<32x16xf32>
    %45 = vector.shape_cast %44 : vector<32x16xf32> to vector<2x16x16xf32>
    %46 = vector.shape_cast %31 : vector<2x16x16xf32> to vector<2x1x16x16xf32>
    %47 = vector.shape_cast %33 : vector<2x16x16xf32> to vector<2x1x16x16xf32>
    %48 = vector.shape_cast %35 : vector<2x16x16xf32> to vector<2x1x16x16xf32>
    %49 = vector.shape_cast %37 : vector<2x16x16xf32> to vector<2x1x16x16xf32>
    %50 = vector.shape_cast %39 : vector<2x16x16xf32> to vector<2x1x16x16xf32>
    %51 = vector.shape_cast %41 : vector<2x16x16xf32> to vector<2x1x16x16xf32>
    %52 = vector.shape_cast %43 : vector<2x16x16xf32> to vector<2x1x16x16xf32>
    %53 = vector.shape_cast %45 : vector<2x16x16xf32> to vector<2x1x16x16xf32>
    %54 = tpu.concatenate %46, %47, %48, %49, %50, %51, %52, %53 in 1 : vector<2x1x16x16xf32>, vector<2x1x16x16xf32>, vector<2x1x16x16xf32>, vector<2x1x16x16xf32>, vector<2x1x16x16xf32>, vector<2x1x16x16xf32>, vector<2x1x16x16xf32>, vector<2x1x16x16xf32> -> vector<2x8x16x16xf32>
    %55 = vector.shape_cast %54 : vector<2x8x16x16xf32> to vector<16x16x16xf32>
    %56 = vector.extract_strided_slice %3 {offsets = [0, 256], sizes = [32, 16], strides = [1, 1]} : vector<32x384xf32> to vector<32x16xf32>
    %57 = vector.shape_cast %56 : vector<32x16xf32> to vector<2x16x16xf32>
    %58 = vector.extract_strided_slice %3 {offsets = [0, 272], sizes = [32, 16], strides = [1, 1]} : vector<32x384xf32> to vector<32x16xf32>
    %59 = vector.shape_cast %58 : vector<32x16xf32> to vector<2x16x16xf32>
    %60 = vector.extract_strided_slice %3 {offsets = [0, 288], sizes = [32, 16], strides = [1, 1]} : vector<32x384xf32> to vector<32x16xf32>
    %61 = vector.shape_cast %60 : vector<32x16xf32> to vector<2x16x16xf32>
    %62 = vector.extract_strided_slice %3 {offsets = [0, 304], sizes = [32, 16], strides = [1, 1]} : vector<32x384xf32> to vector<32x16xf32>
    %63 = vector.shape_cast %62 : vector<32x16xf32> to vector<2x16x16xf32>
    %64 = vector.extract_strided_slice %3 {offsets = [0, 320], sizes = [32, 16], strides = [1, 1]} : vector<32x384xf32> to vector<32x16xf32>
    %65 = vector.shape_cast %64 : vector<32x16xf32> to vector<2x16x16xf32>
    %66 = vector.extract_strided_slice %3 {offsets = [0, 336], sizes = [32, 16], strides = [1, 1]} : vector<32x384xf32> to vector<32x16xf32>
    %67 = vector.shape_cast %66 : vector<32x16xf32> to vector<2x16x16xf32>
    %68 = vector.extract_strided_slice %3 {offsets = [0, 352], sizes = [32, 16], strides = [1, 1]} : vector<32x384xf32> to vector<32x16xf32>
    %69 = vector.shape_cast %68 : vector<32x16xf32> to vector<2x16x16xf32>
    %70 = vector.extract_strided_slice %3 {offsets = [0, 368], sizes = [32, 16], strides = [1, 1]} : vector<32x384xf32> to vector<32x16xf32>
    %71 = vector.shape_cast %70 : vector<32x16xf32> to vector<2x16x16xf32>
    %72 = vector.shape_cast %57 : vector<2x16x16xf32> to vector<2x1x16x16xf32>
    %73 = vector.shape_cast %59 : vector<2x16x16xf32> to vector<2x1x16x16xf32>
    %74 = vector.shape_cast %61 : vector<2x16x16xf32> to vector<2x1x16x16xf32>
    %75 = vector.shape_cast %63 : vector<2x16x16xf32> to vector<2x1x16x16xf32>
    %76 = vector.shape_cast %65 : vector<2x16x16xf32> to vector<2x1x16x16xf32>
    %77 = vector.shape_cast %67 : vector<2x16x16xf32> to vector<2x1x16x16xf32>
    %78 = vector.shape_cast %69 : vector<2x16x16xf32> to vector<2x1x16x16xf32>
    %79 = vector.shape_cast %71 : vector<2x16x16xf32> to vector<2x1x16x16xf32>
    %80 = tpu.concatenate %72, %73, %74, %75, %76, %77, %78, %79 in 1 : vector<2x1x16x16xf32>, vector<2x1x16x16xf32>, vector<2x1x16x16xf32>, vector<2x1x16x16xf32>, vector<2x1x16x16xf32>, vector<2x1x16x16xf32>, vector<2x1x16x16xf32>, vector<2x1x16x16xf32> -> vector<2x8x16x16xf32>
    %81 = vector.shape_cast %80 : vector<2x8x16x16xf32> to vector<16x16x16xf32>
    %cst_4 = arith.constant dense<0.000000e+00> : vector<16x16x16xf32>
    %82 = tpu.matmul %29, %55, %cst_4 {dimension_numbers = #tpu.dot_dimension_numbers<[2], [2], [1], [1], [0, 0, 0, 1, 1, 1], [0], [0]>} : vector<16x16x16xf32>, vector<16x16x16xf32>, vector<16x16x16xf32> -> vector<16x16x16xf32>
    %cst_5 = arith.constant dense<0xFF800000> : vector<16x16xf32>
    %83 = vector.multi_reduction <maximumf>, %82, %cst_5 [2] : vector<16x16x16xf32> to vector<16x16xf32>
    %84 = vector.shape_cast %83 : vector<16x16xf32> to vector<16x16x1xf32>
    %85 = vector.broadcast %84 : vector<16x16x1xf32> to vector<16x16x16xf32>
    %86 = arith.subf %82, %85 : vector<16x16x16xf32>
    %87 = math.exp %86 : vector<16x16x16xf32>
    %cst_6 = arith.constant dense<0.000000e+00> : vector<16x16xf32>
    %88 = vector.multi_reduction <add>, %87, %cst_6 [2] : vector<16x16x16xf32> to vector<16x16xf32>
    %89 = vector.shape_cast %88 : vector<16x16xf32> to vector<16x16x1xf32>
    %90 = tpu.reciprocal %89 : vector<16x16x1xf32> -> vector<16x16x1xf32>
    %91 = vector.broadcast %90 : vector<16x16x1xf32> to vector<16x16x16xf32>
    %92 = arith.mulf %87, %91 : vector<16x16x16xf32>
    %cst_7 = arith.constant dense<0.000000e+00> : vector<16x16x16xf32>
    %93 = tpu.matmul %92, %81, %cst_7 {dimension_numbers = #tpu.dot_dimension_numbers<[2], [1], [1], [2], [0, 0, 0, 1, 1, 2], [0], [0]>} : vector<16x16x16xf32>, vector<16x16x16xf32>, vector<16x16x16xf32> -> vector<16x16x16xf32>
    %94 = vector.shape_cast %93 : vector<16x16x16xf32> to vector<2x8x16x16xf32>
    %95 = vector.extract_strided_slice %94 {offsets = [0, 0, 0, 0], sizes = [2, 1, 16, 16], strides = [1, 1, 1, 1]} : vector<2x8x16x16xf32> to vector<2x1x16x16xf32>
    %96 = vector.shape_cast %95 : vector<2x1x16x16xf32> to vector<2x16x16xf32>
    %97 = vector.extract_strided_slice %94 {offsets = [0, 1, 0, 0], sizes = [2, 1, 16, 16], strides = [1, 1, 1, 1]} : vector<2x8x16x16xf32> to vector<2x1x16x16xf32>
    %98 = vector.shape_cast %97 : vector<2x1x16x16xf32> to vector<2x16x16xf32>
    %99 = vector.extract_strided_slice %94 {offsets = [0, 2, 0, 0], sizes = [2, 1, 16, 16], strides = [1, 1, 1, 1]} : vector<2x8x16x16xf32> to vector<2x1x16x16xf32>
    %100 = vector.shape_cast %99 : vector<2x1x16x16xf32> to vector<2x16x16xf32>
    %101 = vector.extract_strided_slice %94 {offsets = [0, 3, 0, 0], sizes = [2, 1, 16, 16], strides = [1, 1, 1, 1]} : vector<2x8x16x16xf32> to vector<2x1x16x16xf32>
    %102 = vector.shape_cast %101 : vector<2x1x16x16xf32> to vector<2x16x16xf32>
    %103 = vector.extract_strided_slice %94 {offsets = [0, 4, 0, 0], sizes = [2, 1, 16, 16], strides = [1, 1, 1, 1]} : vector<2x8x16x16xf32> to vector<2x1x16x16xf32>
    %104 = vector.shape_cast %103 : vector<2x1x16x16xf32> to vector<2x16x16xf32>
    %105 = vector.extract_strided_slice %94 {offsets = [0, 5, 0, 0], sizes = [2, 1, 16, 16], strides = [1, 1, 1, 1]} : vector<2x8x16x16xf32> to vector<2x1x16x16xf32>
    %106 = vector.shape_cast %105 : vector<2x1x16x16xf32> to vector<2x16x16xf32>
    %107 = vector.extract_strided_slice %94 {offsets = [0, 6, 0, 0], sizes = [2, 1, 16, 16], strides = [1, 1, 1, 1]} : vector<2x8x16x16xf32> to vector<2x1x16x16xf32>
    %108 = vector.shape_cast %107 : vector<2x1x16x16xf32> to vector<2x16x16xf32>
    %109 = vector.extract_strided_slice %94 {offsets = [0, 7, 0, 0], sizes = [2, 1, 16, 16], strides = [1, 1, 1, 1]} : vector<2x8x16x16xf32> to vector<2x1x16x16xf32>
    %110 = vector.shape_cast %109 : vector<2x1x16x16xf32> to vector<2x16x16xf32>
    %111 = tpu.concatenate %96, %98, %100, %102, %104, %106, %108, %110 in 2 : vector<2x16x16xf32>, vector<2x16x16xf32>, vector<2x16x16xf32>, vector<2x16x16xf32>, vector<2x16x16xf32>, vector<2x16x16xf32>, vector<2x16x16xf32>, vector<2x16x16xf32> -> vector<2x16x128xf32>
    %112 = vector.shape_cast %111 : vector<2x16x128xf32> to vector<32x128xf32>
    %c0_8 = arith.constant 0 : index
    %c0_9 = arith.constant 0 : index
    %113 = vector.load %arg3[%c0_8, %c0_9] : memref<128x128xf32, #tpu.memory_space<vmem>>, vector<128x128xf32>
    %cst_10 = arith.constant dense<0.000000e+00> : vector<32x128xf32>
    %114 = tpu.matmul %112, %113, %cst_10 {dimension_numbers = #tpu.dot_dimension_numbers<[1], [0], [0], [1], [0, 0, 1, 1], [], []>} : vector<32x128xf32>, vector<128x128xf32>, vector<32x128xf32> -> vector<32x128xf32>
    %c0_11 = arith.constant 0 : index
    %c0_12 = arith.constant 0 : index
    %115 = vector.load %arg4[%c0_11, %c0_12] : memref<1x128xf32, #tpu.memory_space<vmem>>, vector<1x128xf32>
    %116 = vector.broadcast %115 : vector<1x128xf32> to vector<32x128xf32>
    %117 = arith.addf %114, %116 : vector<32x128xf32>
    %118 = vector.shape_cast %117 : vector<32x128xf32> to vector<2x16x128xf32>
    %c0_13 = arith.constant 0 : index
    %c0_14 = arith.constant 0 : index
    %c0_15 = arith.constant 0 : index
    %119 = vector.load %arg5[%c0_13, %c0_14, %c0_15] : memref<2x16x128xf32, #tpu.memory_space<vmem>>, vector<2x16x128xf32>
    tpu.vector_store %arg5[%c0_13, %c0_14, %c0_15], %118 {strides = array<i32>} : memref<2x16x128xf32, #tpu.memory_space<vmem>>, vector<2x16x128xf32>,
    return
  }
  func.func @transform_0(%arg0: i32) -> (i32, i32, i32) {
    %c0_i32 = arith.constant 0 : i32
    %c0_i32_0 = arith.constant 0 : i32
    %c0_i32_1 = arith.constant 0 : i32
    return %arg0, %c0_i32, %c0_i32_0 : i32, i32, i32
  }
  func.func @transform_1(%arg0: i32) -> (i32, i32) {
    %c0_i32 = arith.constant 0 : i32
    %c0_i32_0 = arith.constant 0 : i32
    %c0_i32_1 = arith.constant 0 : i32
    return %c0_i32, %c0_i32_0 : i32, i32
  }
  func.func @transform_2(%arg0: i32) -> (i32, i32) {
    %c0_i32 = arith.constant 0 : i32
    %c0_i32_0 = arith.constant 0 : i32
    %c0_i32_1 = arith.constant 0 : i32
    return %c0_i32, %c0_i32_0 : i32, i32
  }
  func.func @transform_3(%arg0: i32) -> (i32, i32) {
    %c0_i32 = arith.constant 0 : i32
    %c0_i32_0 = arith.constant 0 : i32
    %c0_i32_1 = arith.constant 0 : i32
    return %c0_i32, %c0_i32_0 : i32, i32
  }
  func.func @transform_4(%arg0: i32) -> (i32, i32, i32) {
    %c0_i32 = arith.constant 0 : i32
    %c0_i32_0 = arith.constant 0 : i32
    %c0_i32_1 = arith.constant 0 : i32
    return %arg0, %c0_i32, %c0_i32_0 : i32, i32, i32
  }
}

</mosaic_0001>

<llo_original>
// kernel: tpu_custom_call.1
$region0: #{tpu_custom_call.1}
  #allocation0 [shape = 'u32[]', space=smem, size = 0x4, offset = 0x4, fixed_abs, tag = 'smem constant byte address 0x4 - core index']
  #allocation1 [shape = 'u32[72,128]{1,0:T(1,128)}', space=vmem, size = 0x9000, scoped, tag = 'internal scratch']
  %s0 = inlined_call_operand.hbm [shape: f32[2,16,128], index: 0, kind: input, shape index: {}]
  %s1 = inlined_call_operand.hbm [shape: f32[128,384], index: 1, kind: input, shape index: {}]
  %s2 = inlined_call_operand.hbm [shape: f32[128,128], index: 2, kind: input, shape index: {}]
  %s3 = inlined_call_operand.vmem [shape: f32[1,128], index: 3, kind: input, shape index: {}]
  %s4 = inlined_call_operand.hbm [shape: f32[2,16,128], index: 4, kind: output, shape index: {}]
  %s5 = sld [smem:[#allocation0]]
  $region38: #{tpu_custom_call.1} parent=0
    _
  %s7 = ssub.s32 1, %s5
  %s8 = scalar_select 0, %s7, %s5
  $region1: #{tpu_custom_call.1} parent=0
    #allocation2 [shape = 'u8[16384]{0}', space=vmem, size = 0x4000, scoped, tag = 'input window, operand 0, single buffered']
    #allocation3 [shape = 's32[1]{0}', space=sflag, size = 0x4, scoped, tag = 'scoped memory for tpu_custom_call.1']
    #allocation4 [shape = 's32[1]{0}', space=sflag, size = 0x4, scoped, tag = 'scoped memory for tpu_custom_call.1']
    #allocation5 [shape = 'u8[196608]{0}', space=vmem, size = 0x30000, scoped, tag = 'input window, operand 1, single buffered']
    #allocation6 [shape = 's32[1]{0}', space=sflag, size = 0x4, scoped, tag = 'scoped memory for tpu_custom_call.1']
    #allocation7 [shape = 'u8[65536]{0}', space=vmem, size = 0x10000, scoped, tag = 'input window, operand 2, single buffered']
    #allocation8 [shape = 'u8[16384]{0}', space=vmem, size = 0x4000, scoped, tag = 'output window, operand 0, single buffered']
    %9 = vsyncpa [#allocation3], 0
    %10 = vsyncpa [#allocation6], 0
    %11 = vsyncpa [#allocation4], 0
    // Predicated region
    $region2: #{tpu_custom_call.1} parent=1 // pred_check
      _
    $region3: #{tpu_custom_call.1} parent=1 // pred_check_branch
      %13 = sbr.rel (0) target = $region5
    $region4: #{tpu_custom_call.1} parent=1 // pred_region
      %15 = vsyncadd [#allocation3], 0
      %s16 = sshll.u32 %s0, 4
      %s17 = int_to_ptr.hbm [resolvable:$true] %s16
      %s18 = sshll.u32 [#allocation2], 4
      %s19 = int_to_ptr.vmem [resolvable:$true] %s18
      %24 = dma.hbm_to_vmem [thread:$0]  %s17, 512, %s19, [#allocation3], 128, 128, 8
    $region5: #{tpu_custom_call.1} parent=1 // pred_fallthru
      _
    // Predicated region
    $region6: #{tpu_custom_call.1} parent=1 // pred_check
      _
    $region7: #{tpu_custom_call.1} parent=1 // pred_check_branch
      %26 = sbr.rel (0) target = $region9
    $region8: #{tpu_custom_call.1} parent=1 // pred_region
      %28 = vsyncadd [#allocation6], 0
      %s29 = sshll.u32 %s1, 4
      %s30 = int_to_ptr.hbm [resolvable:$true] %s29
      %s31 = sshll.u32 [#allocation5], 4
      %s32 = int_to_ptr.vmem [resolvable:$true] %s31
      %37 = dma.hbm_to_vmem [thread:$0]  %s30, 6144, %s32, [#allocation6], 384, 384, 24
    $region9: #{tpu_custom_call.1} parent=1 // pred_fallthru
      _
    // Predicated region
    $region10: #{tpu_custom_call.1} parent=1 // pred_check
      _
    $region11: #{tpu_custom_call.1} parent=1 // pred_check_branch
      %39 = sbr.rel (0) target = $region13
    $region12: #{tpu_custom_call.1} parent=1 // pred_region
      %41 = vsyncadd [#allocation6], 0
      %s42 = sshll.u32 %s2, 4
      %s43 = int_to_ptr.hbm [resolvable:$true] %s42
      %s44 = sshll.u32 [#allocation7], 4
      %s45 = int_to_ptr.vmem [resolvable:$true] %s44
      %50 = dma.hbm_to_vmem [thread:$0]  %s43, 2048, %s45, [#allocation6], 128, 128, 8
    $region13: #{tpu_custom_call.1} parent=1 // pred_fallthru
      _
    // Predicated region
    $region14: #{tpu_custom_call.1} parent=1 // pred_check
      _
    $region15: #{tpu_custom_call.1} parent=1 // pred_check_branch
      %52 = sbr.rel (0) target = $region17
    $region16: #{tpu_custom_call.1} parent=1 // pred_region
      _
    $region17: #{tpu_custom_call.1} parent=1 // pred_fallthru
      _
    // Predicated region
    $region18: #{tpu_custom_call.1} parent=1 // pred_check
      _
    $region19: #{tpu_custom_call.1} parent=1 // pred_check_branch
      %54 = sbr.rel (0) target = $region21
    $region20: #{tpu_custom_call.1} parent=1 // pred_region
      %56 = dma.done [#allocation3], 512
    $region21: #{tpu_custom_call.1} parent=1 // pred_fallthru
      _
    // Predicated region
    $region22: #{tpu_custom_call.1} parent=1 // pred_check
      _
    $region23: #{tpu_custom_call.1} parent=1 // pred_check_branch
      %58 = sbr.rel (0) target = $region25
    $region24: #{tpu_custom_call.1} parent=1 // pred_region
      %60 = dma.done [#allocation6], 6144
    $region25: #{tpu_custom_call.1} parent=1 // pred_fallthru
      _
    // Predicated region
    $region26: #{tpu_custom_call.1} parent=1 // pred_check
      _
    $region27: #{tpu_custom_call.1} parent=1 // pred_check_branch
      %62 = sbr.rel (0) target = $region29
    $region28: #{tpu_custom_call.1} parent=1 // pred_region
      %64 = dma.done [#allocation6], 2048
    $region29: #{tpu_custom_call.1} parent=1 // pred_fallthru
      _
    %v65 = vld [vmem:[#allocation2] sm:$0xff]
    %v66 = vld [vmem:[#allocation2 + $0x8] sm:$0xff]
    %v67 = vld [vmem:[#allocation2 + $0x10] sm:$0xff]
    %v68 = vld [vmem:[#allocation2 + $0x18] sm:$0xff]
    %v69 = vld [vmem:[#allocation5] sm:$0xff]
    %v70 = vld [vmem:[#allocation5 + $0x8] sm:$0xff]
    %v71 = vld [vmem:[#allocation5 + $0x10] sm:$0xff]
    %v72 = vld [vmem:[#allocation5 + $0x18] sm:$0xff]
    %v73 = vld [vmem:[#allocation5 + $0x20] sm:$0xff]
    %v74 = vld [vmem:[#allocation5 + $0x28] sm:$0xff]
    %v75 = vld [vmem:[#allocation5 + $0x30] sm:$0xff]
    %v76 = vld [vmem:[#allocation5 + $0x38] sm:$0xff]
    %v77 = vld [vmem:[#allocation5 + $0x40] sm:$0xff]
    %v78 = vld [vmem:[#allocation5 + $0x48] sm:$0xff]
    %v79 = vld [vmem:[#allocation5 + $0x50] sm:$0xff]
    %v80 = vld [vmem:[#allocation5 + $0x58] sm:$0xff]
    %v81 = vld [vmem:[#allocation5 + $0x60] sm:$0xff]
    %v82 = vld [vmem:[#allocation5 + $0x68] sm:$0xff]
    %v83 = vld [vmem:[#allocation5 + $0x70] sm:$0xff]
    %v84 = vld [vmem:[#allocation5 + $0x78] sm:$0xff]
    %v85 = vld [vmem:[#allocation5 + $0x80] sm:$0xff]
    %v86 = vld [vmem:[#allocation5 + $0x88] sm:$0xff]
    %v87 = vld [vmem:[#allocation5 + $0x90] sm:$0xff]
    %v88 = vld [vmem:[#allocation5 + $0x98] sm:$0xff]
    %v89 = vld [vmem:[#allocation5 + $0xa0] sm:$0xff]
    %v90 = vld [vmem:[#allocation5 + $0xa8] sm:$0xff]
    %v91 = vld [vmem:[#allocation5 + $0xb0] sm:$0xff]
    %v92 = vld [vmem:[#allocation5 + $0xb8] sm:$0xff]
    %v93 = vld [vmem:[#allocation5 + $0xc0] sm:$0xff]
    %v94 = vld [vmem:[#allocation5 + $0xc8] sm:$0xff]
    %v95 = vld [vmem:[#allocation5 + $0xd0] sm:$0xff]
    %v96 = vld [vmem:[#allocation5 + $0xd8] sm:$0xff]
    %v97 = vld [vmem:[#allocation5 + $0xe0] sm:$0xff]
    %v98 = vld [vmem:[#allocation5 + $0xe8] sm:$0xff]
    %v99 = vld [vmem:[#allocation5 + $0xf0] sm:$0xff]
    %v100 = vld [vmem:[#allocation5 + $0xf8] sm:$0xff]
    %v101 = vld [vmem:[#allocation5 + $0x100] sm:$0xff]
    %v102 = vld [vmem:[#allocation5 + $0x108] sm:$0xff]
    %v103 = vld [vmem:[#allocation5 + $0x110] sm:$0xff]
    %v104 = vld [vmem:[#allocation5 + $0x118] sm:$0xff]
    %v105 = vld [vmem:[#allocation5 + $0x120] sm:$0xff]
    %v106 = vld [vmem:[#allocation5 + $0x128] sm:$0xff]
    %v107 = vld [vmem:[#allocation5 + $0x130] sm:$0xff]
    %v108 = vld [vmem:[#allocation5 + $0x138] sm:$0xff]
    %v109 = vld [vmem:[#allocation5 + $0x140] sm:$0xff]
    %v110 = vld [vmem:[#allocation5 + $0x148] sm:$0xff]
    %v111 = vld [vmem:[#allocation5 + $0x150] sm:$0xff]
    %v112 = vld [vmem:[#allocation5 + $0x158] sm:$0xff]
    %v113 = vld [vmem:[#allocation5 + $0x160] sm:$0xff]
    %v114 = vld [vmem:[#allocation5 + $0x168] sm:$0xff]
    %v115 = vld [vmem:[#allocation5 + $0x170] sm:$0xff]
    %v116 = vld [vmem:[#allocation5 + $0x178] sm:$0xff]
    %117 = vmatpush.msra.mxu0 %v114
    %118 = vmatpush.msra.mxu0 %v111
    %119 = vmatpush.msra.mxu0 %v108
    %120 = vmatpush.msra.mxu0 %v105
    %121 = vmatpush.msra.mxu0 %v102
    %122 = vmatpush.msra.mxu0 %v99
    %123 = vmatpush.msra.mxu0 %v96
    %124 = vmatpush.msra.mxu0 %v93
    %125 = vmatpush.msra.mxu0 %v90
    %126 = vmatpush.msra.mxu0 %v87
    %127 = vmatpush.msra.mxu0 %v84
    %128 = vmatpush.msra.mxu0 %v81
    %129 = vmatpush.msra.mxu0 %v78
    %130 = vmatpush.msra.mxu0 %v75
    %131 = vmatpush.msra.mxu0 %v72
    %132 = vmatpush.msra.mxu0 %v69
    %133 = vmatmul.f32.gmra.mxu0 %v65
    %v134 = vpop.f32.mrf.mxu0
    %v135 = vadd.f32 0.0, %v134
    %136 = vmatmul.f32.gmra.mxu0 %v66
    %v137 = vpop.f32.mrf.mxu0
    %v138 = vadd.f32 0.0, %v137
    %139 = vmatmul.f32.gmra.mxu0 %v67
    %v140 = vpop.f32.mrf.mxu0
    %v141 = vadd.f32 0.0, %v140
    %142 = vmatmul.f32.gmra.mxu0 %v68
    %v143 = vpop.f32.mrf.mxu0
    %v144 = vadd.f32 0.0, %v143
    %145 = vdwg.mxu0
    %146 = vmatpush.msra.mxu0 %v115
    %147 = vmatpush.msra.mxu0 %v112
    %148 = vmatpush.msra.mxu0 %v109
    %149 = vmatpush.msra.mxu0 %v106
    %150 = vmatpush.msra.mxu0 %v103
    %151 = vmatpush.msra.mxu0 %v100
    %152 = vmatpush.msra.mxu0 %v97
    %153 = vmatpush.msra.mxu0 %v94
    %154 = vmatpush.msra.mxu0 %v91
    %155 = vmatpush.msra.mxu0 %v88
    %156 = vmatpush.msra.mxu0 %v85
    %157 = vmatpush.msra.mxu0 %v82
    %158 = vmatpush.msra.mxu0 %v79
    %159 = vmatpush.msra.mxu0 %v76
    %160 = vmatpush.msra.mxu0 %v73
    %161 = vmatpush.msra.mxu0 %v70
    %162 = vmatmul.f32.gmra.mxu0 %v65
    %v163 = vpop.f32.mrf.mxu0
    %v164 = vadd.f32 0.0, %v163
    %165 = vmatmul.f32.gmra.mxu0 %v66
    %v166 = vpop.f32.mrf.mxu0
    %v167 = vadd.f32 0.0, %v166
    %168 = vmatmul.f32.gmra.mxu0 %v67
    %v169 = vpop.f32.mrf.mxu0
    %v170 = vadd.f32 0.0, %v169
    %171 = vmatmul.f32.gmra.mxu0 %v68
    %v172 = vpop.f32.mrf.mxu0
    %v173 = vadd.f32 0.0, %v172
    %174 = vdwg.mxu0
    %175 = vmatpush.msra.mxu0 %v116
    %176 = vmatpush.msra.mxu0 %v113
    %177 = vmatpush.msra.mxu0 %v110
    %178 = vmatpush.msra.mxu0 %v107
    %179 = vmatpush.msra.mxu0 %v104
    %180 = vmatpush.msra.mxu0 %v101
    %181 = vmatpush.msra.mxu0 %v98
    %182 = vmatpush.msra.mxu0 %v95
    %183 = vmatpush.msra.mxu0 %v92
    %184 = vmatpush.msra.mxu0 %v89
    %185 = vmatpush.msra.mxu0 %v86
    %186 = vmatpush.msra.mxu0 %v83
    %187 = vmatpush.msra.mxu0 %v80
    %188 = vmatpush.msra.mxu0 %v77
    %189 = vmatpush.msra.mxu0 %v74
    %190 = vmatpush.msra.mxu0 %v71
    %191 = vmatmul.f32.gmra.mxu0 %v65
    %v192 = vpop.f32.mrf.mxu0
    %v193 = vadd.f32 0.0, %v192
    %194 = vmatmul.f32.gmra.mxu0 %v66
    %v195 = vpop.f32.mrf.mxu0
    %v196 = vadd.f32 0.0, %v195
    %197 = vmatmul.f32.gmra.mxu0 %v67
    %v198 = vpop.f32.mrf.mxu0
    %v199 = vadd.f32 0.0, %v198
    %200 = vmatmul.f32.gmra.mxu0 %v68
    %v201 = vpop.f32.mrf.mxu0
    %v202 = vadd.f32 0.0, %v201
    %203 = vdwg.mxu0
    %208 = vrot.lane.b32.xlu0 %v135, 112
    %v209 = vpop.permute.xlu0 %208
    %210 = vrot.lane.b32.xlu0 %v138, 112
    %v211 = vpop.permute.xlu0 %210
    %212 = vrot.lane.b32.xlu0 %v141, 112
    %v213 = vpop.permute.xlu0 %212
    %214 = vrot.lane.b32.xlu0 %v144, 112
    %v215 = vpop.permute.xlu0 %214
    %216 = vrot.lane.b32.xlu0 %v135, 96
    %v217 = vpop.permute.xlu0 %216
    %218 = vrot.lane.b32.xlu0 %v138, 96
    %v219 = vpop.permute.xlu0 %218
    %220 = vrot.lane.b32.xlu0 %v141, 96
    %v221 = vpop.permute.xlu0 %220
    %222 = vrot.lane.b32.xlu0 %v144, 96
    %v223 = vpop.permute.xlu0 %222
    %224 = vrot.lane.b32.xlu0 %v135, 80
    %v225 = vpop.permute.xlu0 %224
    %226 = vrot.lane.b32.xlu0 %v138, 80
    %v227 = vpop.permute.xlu0 %226
    %228 = vrot.lane.b32.xlu0 %v141, 80
    %v229 = vpop.permute.xlu0 %228
    %230 = vrot.lane.b32.xlu0 %v144, 80
    %v231 = vpop.permute.xlu0 %230
    %232 = vrot.lane.b32.xlu0 %v135, 64
    %v233 = vpop.permute.xlu0 %232
    %234 = vrot.lane.b32.xlu0 %v138, 64
    %v235 = vpop.permute.xlu0 %234
    %236 = vrot.lane.b32.xlu0 %v141, 64
    %v237 = vpop.permute.xlu0 %236
    %238 = vrot.lane.b32.xlu0 %v144, 64
    %v239 = vpop.permute.xlu0 %238
    %240 = vrot.lane.b32.xlu0 %v135, 48
    %v241 = vpop.permute.xlu0 %240
    %242 = vrot.lane.b32.xlu0 %v138, 48
    %v243 = vpop.permute.xlu0 %242
    %244 = vrot.lane.b32.xlu0 %v141, 48
    %v245 = vpop.permute.xlu0 %244
    %246 = vrot.lane.b32.xlu0 %v144, 48
    %v247 = vpop.permute.xlu0 %246
    %248 = vrot.lane.b32.xlu0 %v135, 32
    %v249 = vpop.permute.xlu0 %248
    %250 = vrot.lane.b32.xlu0 %v138, 32
    %v251 = vpop.permute.xlu0 %250
    %252 = vrot.lane.b32.xlu0 %v141, 32
    %v253 = vpop.permute.xlu0 %252
    %254 = vrot.lane.b32.xlu0 %v144, 32
    %v255 = vpop.permute.xlu0 %254
    %256 = vrot.lane.b32.xlu0 %v135, 16
    %v257 = vpop.permute.xlu0 %256
    %258 = vrot.lane.b32.xlu0 %v138, 16
    %v259 = vpop.permute.xlu0 %258
    %260 = vrot.lane.b32.xlu0 %v141, 16
    %v261 = vpop.permute.xlu0 %260
    %262 = vrot.lane.b32.xlu0 %v144, 16
    %v263 = vpop.permute.xlu0 %262
    %268 = vrot.lane.b32.xlu0 %v164, 112
    %v269 = vpop.permute.xlu0 %268
    %270 = vrot.lane.b32.xlu0 %v167, 112
    %v271 = vpop.permute.xlu0 %270
    %272 = vrot.lane.b32.xlu0 %v170, 112
    %v273 = vpop.permute.xlu0 %272
    %274 = vrot.lane.b32.xlu0 %v173, 112
    %v275 = vpop.permute.xlu0 %274
    %276 = vrot.lane.b32.xlu0 %v164, 96
    %v277 = vpop.permute.xlu0 %276
    %278 = vrot.lane.b32.xlu0 %v167, 96
    %v279 = vpop.permute.xlu0 %278
    %280 = vrot.lane.b32.xlu0 %v170, 96
    %v281 = vpop.permute.xlu0 %280
    %282 = vrot.lane.b32.xlu0 %v173, 96
    %v283 = vpop.permute.xlu0 %282
    %284 = vrot.lane.b32.xlu0 %v164, 80
    %v285 = vpop.permute.xlu0 %284
    %286 = vrot.lane.b32.xlu0 %v167, 80
    %v287 = vpop.permute.xlu0 %286
    %288 = vrot.lane.b32.xlu0 %v170, 80
    %v289 = vpop.permute.xlu0 %288
    %290 = vrot.lane.b32.xlu0 %v173, 80
    %v291 = vpop.permute.xlu0 %290
    %292 = vrot.lane.b32.xlu0 %v164, 64
    %v293 = vpop.permute.xlu0 %292
    %294 = vrot.lane.b32.xlu0 %v167, 64
    %v295 = vpop.permute.xlu0 %294
    %296 = vrot.lane.b32.xlu0 %v170, 64
    %v297 = vpop.permute.xlu0 %296
    %298 = vrot.lane.b32.xlu0 %v173, 64
    %v299 = vpop.permute.xlu0 %298
    %300 = vrot.lane.b32.xlu0 %v164, 48
    %v301 = vpop.permute.xlu0 %300
    %302 = vrot.lane.b32.xlu0 %v167, 48
    %v303 = vpop.permute.xlu0 %302
    %304 = vrot.lane.b32.xlu0 %v170, 48
    %v305 = vpop.permute.xlu0 %304
    %306 = vrot.lane.b32.xlu0 %v173, 48
    %v307 = vpop.permute.xlu0 %306
    %308 = vrot.lane.b32.xlu0 %v164, 32
    %v309 = vpop.permute.xlu0 %308
    %310 = vrot.lane.b32.xlu0 %v167, 32
    %v311 = vpop.permute.xlu0 %310
    %312 = vrot.lane.b32.xlu0 %v170, 32
    %v313 = vpop.permute.xlu0 %312
    %314 = vrot.lane.b32.xlu0 %v173, 32
    %v315 = vpop.permute.xlu0 %314
    %316 = vrot.lane.b32.xlu0 %v164, 16
    %v317 = vpop.permute.xlu0 %316
    %318 = vrot.lane.b32.xlu0 %v167, 16
    %v319 = vpop.permute.xlu0 %318
    %320 = vrot.lane.b32.xlu0 %v170, 16
    %v321 = vpop.permute.xlu0 %320
    %322 = vrot.lane.b32.xlu0 %v173, 16
    %v323 = vpop.permute.xlu0 %322
    %328 = vrot.lane.b32.xlu0 %v193, 112
    %v329 = vpop.permute.xlu0 %328
    %330 = vrot.lane.b32.xlu0 %v196, 112
    %v331 = vpop.permute.xlu0 %330
    %332 = vrot.lane.b32.xlu0 %v199, 112
    %v333 = vpop.permute.xlu0 %332
    %334 = vrot.lane.b32.xlu0 %v202, 112
    %v335 = vpop.permute.xlu0 %334
    %340 = vrot.lane.b32.xlu0 %v193, 96
    %v341 = vpop.permute.xlu0 %340
    %342 = vrot.lane.b32.xlu0 %v196, 96
    %v343 = vpop.permute.xlu0 %342
    %344 = vrot.lane.b32.xlu0 %v199, 96
    %v345 = vpop.permute.xlu0 %344
    %346 = vrot.lane.b32.xlu0 %v202, 96
    %v347 = vpop.permute.xlu0 %346
    %352 = vrot.lane.b32.xlu0 %v193, 80
    %v353 = vpop.permute.xlu0 %352
    %354 = vrot.lane.b32.xlu0 %v196, 80
    %v355 = vpop.permute.xlu0 %354
    %356 = vrot.lane.b32.xlu0 %v199, 80
    %v357 = vpop.permute.xlu0 %356
    %358 = vrot.lane.b32.xlu0 %v202, 80
    %v359 = vpop.permute.xlu0 %358
    %364 = vrot.lane.b32.xlu0 %v193, 64
    %v365 = vpop.permute.xlu0 %364
    %366 = vrot.lane.b32.xlu0 %v196, 64
    %v367 = vpop.permute.xlu0 %366
    %368 = vrot.lane.b32.xlu0 %v199, 64
    %v369 = vpop.permute.xlu0 %368
    %370 = vrot.lane.b32.xlu0 %v202, 64
    %v371 = vpop.permute.xlu0 %370
    %376 = vrot.lane.b32.xlu0 %v193, 48
    %v377 = vpop.permute.xlu0 %376
    %378 = vrot.lane.b32.xlu0 %v196, 48
    %v379 = vpop.permute.xlu0 %378
    %380 = vrot.lane.b32.xlu0 %v199, 48
    %v381 = vpop.permute.xlu0 %380
    %382 = vrot.lane.b32.xlu0 %v202, 48
    %v383 = vpop.permute.xlu0 %382
    %388 = vrot.lane.b32.xlu0 %v193, 32
    %v389 = vpop.permute.xlu0 %388
    %390 = vrot.lane.b32.xlu0 %v196, 32
    %v391 = vpop.permute.xlu0 %390
    %392 = vrot.lane.b32.xlu0 %v199, 32
    %v393 = vpop.permute.xlu0 %392
    %394 = vrot.lane.b32.xlu0 %v202, 32
    %v395 = vpop.permute.xlu0 %394
    %400 = vrot.lane.b32.xlu0 %v193, 16
    %v401 = vpop.permute.xlu0 %400
    %402 = vrot.lane.b32.xlu0 %v196, 16
    %v403 = vpop.permute.xlu0 %402
    %404 = vrot.lane.b32.xlu0 %v199, 16
    %v405 = vpop.permute.xlu0 %404
    %406 = vrot.lane.b32.xlu0 %v202, 16
    %v407 = vpop.permute.xlu0 %406
    %vm412 = vcmask 130048
    %v413 = vsel %vm412, %v135, 0
    %v415 = vsel %vm412, %v138, 0
    %v417 = vsel %vm412, %v164, 0
    %v419 = vsel %vm412, %v167, 0
    %421 = vmatpush.xpose.msra.mxu0 0.0
    %422 = vmatpush.xpose.msra.mxu0 0.0
    %423 = vmatpush.xpose.msra.mxu0 0.0
    %424 = vmatpush.xpose.msra.mxu0 0.0
    %425 = vmatpush.xpose.msra.mxu0 0.0
    %426 = vmatpush.xpose.msra.mxu0 0.0
    %427 = vmatpush.xpose.msra.mxu0 0.0
    %428 = vmatpush.xpose.msra.mxu0 0.0
    %429 = vmatpush.xpose.msra.mxu0 0.0
    %430 = vmatpush.xpose.msra.mxu0 0.0
    %431 = vmatpush.xpose.msra.mxu0 0.0
    %432 = vmatpush.xpose.msra.mxu0 0.0
    %433 = vmatpush.xpose.msra.mxu0 0.0
    %434 = vmatpush.xpose.msra.mxu0 0.0
    %435 = vmatpush.xpose.msra.mxu0 %v419
    %436 = vmatpush.xpose.msra.mxu0 %v417
    %437 = vmatmul.f32.gmra.mxu0 %v413
    %v438 = vpop.f32.mrf.mxu0
    %v439 = vadd.f32 0.0, %v438
    %440 = vmatmul.f32.gmra.mxu0 %v415
    %v441 = vpop.f32.mrf.mxu0
    %v442 = vadd.f32 0.0, %v441
    %443 = vdwg.mxu0
    %v444 = vsel %vm412, %v209, 0
    %v446 = vsel %vm412, %v211, 0
    %v448 = vsel %vm412, %v269, 0
    %v450 = vsel %vm412, %v271, 0
    %452 = vmatpush.xpose.msra.mxu0 0.0
    %453 = vmatpush.xpose.msra.mxu0 0.0
    %454 = vmatpush.xpose.msra.mxu0 0.0
    %455 = vmatpush.xpose.msra.mxu0 0.0
    %456 = vmatpush.xpose.msra.mxu0 0.0
    %457 = vmatpush.xpose.msra.mxu0 0.0
    %458 = vmatpush.xpose.msra.mxu0 0.0
    %459 = vmatpush.xpose.msra.mxu0 0.0
    %460 = vmatpush.xpose.msra.mxu0 0.0
    %461 = vmatpush.xpose.msra.mxu0 0.0
    %462 = vmatpush.xpose.msra.mxu0 0.0
    %463 = vmatpush.xpose.msra.mxu0 0.0
    %464 = vmatpush.xpose.msra.mxu0 0.0
    %465 = vmatpush.xpose.msra.mxu0 0.0
    %466 = vmatpush.xpose.msra.mxu0 %v450
    %467 = vmatpush.xpose.msra.mxu0 %v448
    %468 = vmatmul.f32.gmra.mxu0 %v444
    %v469 = vpop.f32.mrf.mxu0
    %v470 = vadd.f32 0.0, %v469
    %471 = vmatmul.f32.gmra.mxu0 %v446
    %v472 = vpop.f32.mrf.mxu0
    %v473 = vadd.f32 0.0, %v472
    %474 = vdwg.mxu0
    %v475 = vsel %vm412, %v217, 0
    %v477 = vsel %vm412, %v219, 0
    %v479 = vsel %vm412, %v277, 0
    %v481 = vsel %vm412, %v279, 0
    %483 = vmatpush.xpose.msra.mxu0 0.0
    %484 = vmatpush.xpose.msra.mxu0 0.0
    %485 = vmatpush.xpose.msra.mxu0 0.0
    %486 = vmatpush.xpose.msra.mxu0 0.0
    %487 = vmatpush.xpose.msra.mxu0 0.0
    %488 = vmatpush.xpose.msra.mxu0 0.0
    %489 = vmatpush.xpose.msra.mxu0 0.0
    %490 = vmatpush.xpose.msra.mxu0 0.0
    %491 = vmatpush.xpose.msra.mxu0 0.0
    %492 = vmatpush.xpose.msra.mxu0 0.0
    %493 = vmatpush.xpose.msra.mxu0 0.0
    %494 = vmatpush.xpose.msra.mxu0 0.0
    %495 = vmatpush.xpose.msra.mxu0 0.0
    %496 = vmatpush.xpose.msra.mxu0 0.0
    %497 = vmatpush.xpose.msra.mxu0 %v481
    %498 = vmatpush.xpose.msra.mxu0 %v479
    %499 = vmatmul.f32.gmra.mxu0 %v475
    %v500 = vpop.f32.mrf.mxu0
    %v501 = vadd.f32 0.0, %v500
    %502 = vmatmul.f32.gmra.mxu0 %v477
    %v503 = vpop.f32.mrf.mxu0
    %v504 = vadd.f32 0.0, %v503
    %505 = vdwg.mxu0
    %v506 = vsel %vm412, %v225, 0
    %v508 = vsel %vm412, %v227, 0
    %v510 = vsel %vm412, %v285, 0
    %v512 = vsel %vm412, %v287, 0
    %514 = vmatpush.xpose.msra.mxu0 0.0
    %515 = vmatpush.xpose.msra.mxu0 0.0
    %516 = vmatpush.xpose.msra.mxu0 0.0
    %517 = vmatpush.xpose.msra.mxu0 0.0
    %518 = vmatpush.xpose.msra.mxu0 0.0
    %519 = vmatpush.xpose.msra.mxu0 0.0
    %520 = vmatpush.xpose.msra.mxu0 0.0
    %521 = vmatpush.xpose.msra.mxu0 0.0
    %522 = vmatpush.xpose.msra.mxu0 0.0
    %523 = vmatpush.xpose.msra.mxu0 0.0
    %524 = vmatpush.xpose.msra.mxu0 0.0
    %525 = vmatpush.xpose.msra.mxu0 0.0
    %526 = vmatpush.xpose.msra.mxu0 0.0
    %527 = vmatpush.xpose.msra.mxu0 0.0
    %528 = vmatpush.xpose.msra.mxu0 %v512
    %529 = vmatpush.xpose.msra.mxu0 %v510
    %530 = vmatmul.f32.gmra.mxu0 %v506
    %v531 = vpop.f32.mrf.mxu0
    %v532 = vadd.f32 0.0, %v531
    %533 = vmatmul.f32.gmra.mxu0 %v508
    %v534 = vpop.f32.mrf.mxu0
    %v535 = vadd.f32 0.0, %v534
    %536 = vdwg.mxu0
    %v537 = vsel %vm412, %v233, 0
    %v539 = vsel %vm412, %v235, 0
    %v541 = vsel %vm412, %v293, 0
    %v543 = vsel %vm412, %v295, 0
    %545 = vmatpush.xpose.msra.mxu0 0.0
    %546 = vmatpush.xpose.msra.mxu0 0.0
    %547 = vmatpush.xpose.msra.mxu0 0.0
    %548 = vmatpush.xpose.msra.mxu0 0.0
    %549 = vmatpush.xpose.msra.mxu0 0.0
    %550 = vmatpush.xpose.msra.mxu0 0.0
    %551 = vmatpush.xpose.msra.mxu0 0.0
    %552 = vmatpush.xpose.msra.mxu0 0.0
    %553 = vmatpush.xpose.msra.mxu0 0.0
    %554 = vmatpush.xpose.msra.mxu0 0.0
    %555 = vmatpush.xpose.msra.mxu0 0.0
    %556 = vmatpush.xpose.msra.mxu0 0.0
    %557 = vmatpush.xpose.msra.mxu0 0.0
    %558 = vmatpush.xpose.msra.mxu0 0.0
    %559 = vmatpush.xpose.msra.mxu0 %v543
    %560 = vmatpush.xpose.msra.mxu0 %v541
    %561 = vmatmul.f32.gmra.mxu0 %v537
    %v562 = vpop.f32.mrf.mxu0
    %v563 = vadd.f32 0.0, %v562
    %564 = vmatmul.f32.gmra.mxu0 %v539
    %v565 = vpop.f32.mrf.mxu0
    %v566 = vadd.f32 0.0, %v565
    %567 = vdwg.mxu0
    %v568 = vsel %vm412, %v241, 0
    %v570 = vsel %vm412, %v243, 0
    %v572 = vsel %vm412, %v301, 0
    %v574 = vsel %vm412, %v303, 0
    %576 = vmatpush.xpose.msra.mxu0 0.0
    %577 = vmatpush.xpose.msra.mxu0 0.0
    %578 = vmatpush.xpose.msra.mxu0 0.0
    %579 = vmatpush.xpose.msra.mxu0 0.0
    %580 = vmatpush.xpose.msra.mxu0 0.0
    %581 = vmatpush.xpose.msra.mxu0 0.0
    %582 = vmatpush.xpose.msra.mxu0 0.0
    %583 = vmatpush.xpose.msra.mxu0 0.0
    %584 = vmatpush.xpose.msra.mxu0 0.0
    %585 = vmatpush.xpose.msra.mxu0 0.0
    %586 = vmatpush.xpose.msra.mxu0 0.0
    %587 = vmatpush.xpose.msra.mxu0 0.0
    %588 = vmatpush.xpose.msra.mxu0 0.0
    %589 = vmatpush.xpose.msra.mxu0 0.0
    %590 = vmatpush.xpose.msra.mxu0 %v574
    %591 = vmatpush.xpose.msra.mxu0 %v572
    %592 = vmatmul.f32.gmra.mxu0 %v568
    %v593 = vpop.f32.mrf.mxu0
    %v594 = vadd.f32 0.0, %v593
    %595 = vmatmul.f32.gmra.mxu0 %v570
    %v596 = vpop.f32.mrf.mxu0
    %v597 = vadd.f32 0.0, %v596
    %598 = vdwg.mxu0
    %v599 = vsel %vm412, %v249, 0
    %v601 = vsel %vm412, %v251, 0
    %v603 = vsel %vm412, %v309, 0
    %v605 = vsel %vm412, %v311, 0
    %607 = vmatpush.xpose.msra.mxu0 0.0
    %608 = vmatpush.xpose.msra.mxu0 0.0
    %609 = vmatpush.xpose.msra.mxu0 0.0
    %610 = vmatpush.xpose.msra.mxu0 0.0
    %611 = vmatpush.xpose.msra.mxu0 0.0
    %612 = vmatpush.xpose.msra.mxu0 0.0
    %613 = vmatpush.xpose.msra.mxu0 0.0
    %614 = vmatpush.xpose.msra.mxu0 0.0
    %615 = vmatpush.xpose.msra.mxu0 0.0
    %616 = vmatpush.xpose.msra.mxu0 0.0
    %617 = vmatpush.xpose.msra.mxu0 0.0
    %618 = vmatpush.xpose.msra.mxu0 0.0
    %619 = vmatpush.xpose.msra.mxu0 0.0
    %620 = vmatpush.xpose.msra.mxu0 0.0
    %621 = vmatpush.xpose.msra.mxu0 %v605
    %622 = vmatpush.xpose.msra.mxu0 %v603
    %623 = vmatmul.f32.gmra.mxu0 %v599
    %v624 = vpop.f32.mrf.mxu0
    %v625 = vadd.f32 0.0, %v624
    %626 = vmatmul.f32.gmra.mxu0 %v601
    %v627 = vpop.f32.mrf.mxu0
    %v628 = vadd.f32 0.0, %v627
    %629 = vdwg.mxu0
    %v630 = vsel %vm412, %v257, 0
    %v632 = vsel %vm412, %v259, 0
    %v634 = vsel %vm412, %v317, 0
    %v636 = vsel %vm412, %v319, 0
    %638 = vmatpush.xpose.msra.mxu0 0.0
    %639 = vmatpush.xpose.msra.mxu0 0.0
    %640 = vmatpush.xpose.msra.mxu0 0.0
    %641 = vmatpush.xpose.msra.mxu0 0.0
    %642 = vmatpush.xpose.msra.mxu0 0.0
    %643 = vmatpush.xpose.msra.mxu0 0.0
    %644 = vmatpush.xpose.msra.mxu0 0.0
    %645 = vmatpush.xpose.msra.mxu0 0.0
    %646 = vmatpush.xpose.msra.mxu0 0.0
    %647 = vmatpush.xpose.msra.mxu0 0.0
    %648 = vmatpush.xpose.msra.mxu0 0.0
    %649 = vmatpush.xpose.msra.mxu0 0.0
    %650 = vmatpush.xpose.msra.mxu0 0.0
    %651 = vmatpush.xpose.msra.mxu0 0.0
    %652 = vmatpush.xpose.msra.mxu0 %v636
    %653 = vmatpush.xpose.msra.mxu0 %v634
    %654 = vmatmul.f32.gmra.mxu0 %v630
    %v655 = vpop.f32.mrf.mxu0
    %v656 = vadd.f32 0.0, %v655
    %657 = vmatmul.f32.gmra.mxu0 %v632
    %v658 = vpop.f32.mrf.mxu0
    %v659 = vadd.f32 0.0, %v658
    %660 = vdwg.mxu0
    %v661 = vsel %vm412, %v141, 0
    %v663 = vsel %vm412, %v144, 0
    %v665 = vsel %vm412, %v170, 0
    %v667 = vsel %vm412, %v173, 0
    %669 = vmatpush.xpose.msra.mxu0 0.0
    %670 = vmatpush.xpose.msra.mxu0 0.0
    %671 = vmatpush.xpose.msra.mxu0 0.0
    %672 = vmatpush.xpose.msra.mxu0 0.0
    %673 = vmatpush.xpose.msra.mxu0 0.0
    %674 = vmatpush.xpose.msra.mxu0 0.0
    %675 = vmatpush.xpose.msra.mxu0 0.0
    %676 = vmatpush.xpose.msra.mxu0 0.0
    %677 = vmatpush.xpose.msra.mxu0 0.0
    %678 = vmatpush.xpose.msra.mxu0 0.0
    %679 = vmatpush.xpose.msra.mxu0 0.0
    %680 = vmatpush.xpose.msra.mxu0 0.0
    %681 = vmatpush.xpose.msra.mxu0 0.0
    %682 = vmatpush.xpose.msra.mxu0 0.0
    %683 = vmatpush.xpose.msra.mxu0 %v667
    %684 = vmatpush.xpose.msra.mxu0 %v665
    %685 = vmatmul.f32.gmra.mxu0 %v661
    %v686 = vpop.f32.mrf.mxu0
    %v687 = vadd.f32 0.0, %v686
    %688 = vmatmul.f32.gmra.mxu0 %v663
    %v689 = vpop.f32.mrf.mxu0
    %v690 = vadd.f32 0.0, %v689
    %691 = vdwg.mxu0
    %v692 = vsel %vm412, %v213, 0
    %v694 = vsel %vm412, %v215, 0
    %v696 = vsel %vm412, %v273, 0
    %v698 = vsel %vm412, %v275, 0
    %700 = vmatpush.xpose.msra.mxu0 0.0
    %701 = vmatpush.xpose.msra.mxu0 0.0
    %702 = vmatpush.xpose.msra.mxu0 0.0
    %703 = vmatpush.xpose.msra.mxu0 0.0
    %704 = vmatpush.xpose.msra.mxu0 0.0
    %705 = vmatpush.xpose.msra.mxu0 0.0
    %706 = vmatpush.xpose.msra.mxu0 0.0
    %707 = vmatpush.xpose.msra.mxu0 0.0
    %708 = vmatpush.xpose.msra.mxu0 0.0
    %709 = vmatpush.xpose.msra.mxu0 0.0
    %710 = vmatpush.xpose.msra.mxu0 0.0
    %711 = vmatpush.xpose.msra.mxu0 0.0
    %712 = vmatpush.xpose.msra.mxu0 0.0
    %713 = vmatpush.xpose.msra.mxu0 0.0
    %714 = vmatpush.xpose.msra.mxu0 %v698
    %715 = vmatpush.xpose.msra.mxu0 %v696
    %716 = vmatmul.f32.gmra.mxu0 %v692
    %v717 = vpop.f32.mrf.mxu0
    %v718 = vadd.f32 0.0, %v717
    %719 = vmatmul.f32.gmra.mxu0 %v694
    %v720 = vpop.f32.mrf.mxu0
    %v721 = vadd.f32 0.0, %v720
    %722 = vdwg.mxu0
    %v723 = vsel %vm412, %v221, 0
    %v725 = vsel %vm412, %v223, 0
    %v727 = vsel %vm412, %v281, 0
    %v729 = vsel %vm412, %v283, 0
    %731 = vmatpush.xpose.msra.mxu0 0.0
    %732 = vmatpush.xpose.msra.mxu0 0.0
    %733 = vmatpush.xpose.msra.mxu0 0.0
    %734 = vmatpush.xpose.msra.mxu0 0.0
    %735 = vmatpush.xpose.msra.mxu0 0.0
    %736 = vmatpush.xpose.msra.mxu0 0.0
    %737 = vmatpush.xpose.msra.mxu0 0.0
    %738 = vmatpush.xpose.msra.mxu0 0.0
    %739 = vmatpush.xpose.msra.mxu0 0.0
    %740 = vmatpush.xpose.msra.mxu0 0.0
    %741 = vmatpush.xpose.msra.mxu0 0.0
    %742 = vmatpush.xpose.msra.mxu0 0.0
    %743 = vmatpush.xpose.msra.mxu0 0.0
    %744 = vmatpush.xpose.msra.mxu0 0.0
    %745 = vmatpush.xpose.msra.mxu0 %v729
    %746 = vmatpush.xpose.msra.mxu0 %v727
    %747 = vmatmul.f32.gmra.mxu0 %v723
    %v748 = vpop.f32.mrf.mxu0
    %v749 = vadd.f32 0.0, %v748
    %750 = vmatmul.f32.gmra.mxu0 %v725
    %v751 = vpop.f32.mrf.mxu0
    %v752 = vadd.f32 0.0, %v751
    %753 = vdwg.mxu0
    %v754 = vsel %vm412, %v229, 0
    %v756 = vsel %vm412, %v231, 0
    %v758 = vsel %vm412, %v289, 0
    %v760 = vsel %vm412, %v291, 0
    %762 = vmatpush.xpose.msra.mxu0 0.0
    %763 = vmatpush.xpose.msra.mxu0 0.0
    %764 = vmatpush.xpose.msra.mxu0 0.0
    %765 = vmatpush.xpose.msra.mxu0 0.0
    %766 = vmatpush.xpose.msra.mxu0 0.0
    %767 = vmatpush.xpose.msra.mxu0 0.0
    %768 = vmatpush.xpose.msra.mxu0 0.0
    %769 = vmatpush.xpose.msra.mxu0 0.0
    %770 = vmatpush.xpose.msra.mxu0 0.0
    %771 = vmatpush.xpose.msra.mxu0 0.0
    %772 = vmatpush.xpose.msra.mxu0 0.0
    %773 = vmatpush.xpose.msra.mxu0 0.0
    %774 = vmatpush.xpose.msra.mxu0 0.0
    %775 = vmatpush.xpose.msra.mxu0 0.0
    %776 = vmatpush.xpose.msra.mxu0 %v760
    %777 = vmatpush.xpose.msra.mxu0 %v758
    %778 = vmatmul.f32.gmra.mxu0 %v754
    %v779 = vpop.f32.mrf.mxu0
    %v780 = vadd.f32 0.0, %v779
    %781 = vmatmul.f32.gmra.mxu0 %v756
    %v782 = vpop.f32.mrf.mxu0
    %v783 = vadd.f32 0.0, %v782
    %784 = vdwg.mxu0
    %v785 = vsel %vm412, %v237, 0
    %v787 = vsel %vm412, %v239, 0
    %v789 = vsel %vm412, %v297, 0
    %v791 = vsel %vm412, %v299, 0
    %793 = vmatpush.xpose.msra.mxu0 0.0
    %794 = vmatpush.xpose.msra.mxu0 0.0
    %795 = vmatpush.xpose.msra.mxu0 0.0
    %796 = vmatpush.xpose.msra.mxu0 0.0
    %797 = vmatpush.xpose.msra.mxu0 0.0
    %798 = vmatpush.xpose.msra.mxu0 0.0
    %799 = vmatpush.xpose.msra.mxu0 0.0
    %800 = vmatpush.xpose.msra.mxu0 0.0
    %801 = vmatpush.xpose.msra.mxu0 0.0
    %802 = vmatpush.xpose.msra.mxu0 0.0
    %803 = vmatpush.xpose.msra.mxu0 0.0
    %804 = vmatpush.xpose.msra.mxu0 0.0
    %805 = vmatpush.xpose.msra.mxu0 0.0
    %806 = vmatpush.xpose.msra.mxu0 0.0
    %807 = vmatpush.xpose.msra.mxu0 %v791
    %808 = vmatpush.xpose.msra.mxu0 %v789
    %809 = vmatmul.f32.gmra.mxu0 %v785
    %v810 = vpop.f32.mrf.mxu0
    %v811 = vadd.f32 0.0, %v810
    %812 = vmatmul.f32.gmra.mxu0 %v787
    %v813 = vpop.f32.mrf.mxu0
    %v814 = vadd.f32 0.0, %v813
    %815 = vdwg.mxu0
    %v816 = vsel %vm412, %v245, 0
    %v818 = vsel %vm412, %v247, 0
    %v820 = vsel %vm412, %v305, 0
    %v822 = vsel %vm412, %v307, 0
    %824 = vmatpush.xpose.msra.mxu0 0.0
    %825 = vmatpush.xpose.msra.mxu0 0.0
    %826 = vmatpush.xpose.msra.mxu0 0.0
    %827 = vmatpush.xpose.msra.mxu0 0.0
    %828 = vmatpush.xpose.msra.mxu0 0.0
    %829 = vmatpush.xpose.msra.mxu0 0.0
    %830 = vmatpush.xpose.msra.mxu0 0.0
    %831 = vmatpush.xpose.msra.mxu0 0.0
    %832 = vmatpush.xpose.msra.mxu0 0.0
    %833 = vmatpush.xpose.msra.mxu0 0.0
    %834 = vmatpush.xpose.msra.mxu0 0.0
    %835 = vmatpush.xpose.msra.mxu0 0.0
    %836 = vmatpush.xpose.msra.mxu0 0.0
    %837 = vmatpush.xpose.msra.mxu0 0.0
    %838 = vmatpush.xpose.msra.mxu0 %v822
    %839 = vmatpush.xpose.msra.mxu0 %v820
    %840 = vmatmul.f32.gmra.mxu0 %v816
    %v841 = vpop.f32.mrf.mxu0
    %v842 = vadd.f32 0.0, %v841
    %843 = vmatmul.f32.gmra.mxu0 %v818
    %v844 = vpop.f32.mrf.mxu0
    %v845 = vadd.f32 0.0, %v844
    %846 = vdwg.mxu0
    %v847 = vsel %vm412, %v253, 0
    %v849 = vsel %vm412, %v255, 0
    %v851 = vsel %vm412, %v313, 0
    %v853 = vsel %vm412, %v315, 0
    %855 = vmatpush.xpose.msra.mxu0 0.0
    %856 = vmatpush.xpose.msra.mxu0 0.0
    %857 = vmatpush.xpose.msra.mxu0 0.0
    %858 = vmatpush.xpose.msra.mxu0 0.0
    %859 = vmatpush.xpose.msra.mxu0 0.0
    %860 = vmatpush.xpose.msra.mxu0 0.0
    %861 = vmatpush.xpose.msra.mxu0 0.0
    %862 = vmatpush.xpose.msra.mxu0 0.0
    %863 = vmatpush.xpose.msra.mxu0 0.0
    %864 = vmatpush.xpose.msra.mxu0 0.0
    %865 = vmatpush.xpose.msra.mxu0 0.0
    %866 = vmatpush.xpose.msra.mxu0 0.0
    %867 = vmatpush.xpose.msra.mxu0 0.0
    %868 = vmatpush.xpose.msra.mxu0 0.0
    %869 = vmatpush.xpose.msra.mxu0 %v853
    %870 = vmatpush.xpose.msra.mxu0 %v851
    %871 = vmatmul.f32.gmra.mxu0 %v847
    %v872 = vpop.f32.mrf.mxu0
    %v873 = vadd.f32 0.0, %v872
    %874 = vmatmul.f32.gmra.mxu0 %v849
    %v875 = vpop.f32.mrf.mxu0
    %v876 = vadd.f32 0.0, %v875
    %877 = vdwg.mxu0
    %v878 = vsel %vm412, %v261, 0
    %v880 = vsel %vm412, %v263, 0
    %v882 = vsel %vm412, %v321, 0
    %v884 = vsel %vm412, %v323, 0
    %886 = vmatpush.xpose.msra.mxu0 0.0
    %887 = vmatpush.xpose.msra.mxu0 0.0
    %888 = vmatpush.xpose.msra.mxu0 0.0
    %889 = vmatpush.xpose.msra.mxu0 0.0
    %890 = vmatpush.xpose.msra.mxu0 0.0
    %891 = vmatpush.xpose.msra.mxu0 0.0
    %892 = vmatpush.xpose.msra.mxu0 0.0
    %893 = vmatpush.xpose.msra.mxu0 0.0
    %894 = vmatpush.xpose.msra.mxu0 0.0
    %895 = vmatpush.xpose.msra.mxu0 0.0
    %896 = vmatpush.xpose.msra.mxu0 0.0
    %897 = vmatpush.xpose.msra.mxu0 0.0
    %898 = vmatpush.xpose.msra.mxu0 0.0
    %899 = vmatpush.xpose.msra.mxu0 0.0
    %900 = vmatpush.xpose.msra.mxu0 %v884
    %901 = vmatpush.xpose.msra.mxu0 %v882
    %902 = vmatmul.f32.gmra.mxu0 %v878
    %v903 = vpop.f32.mrf.mxu0
    %v904 = vadd.f32 0.0, %v903
    %905 = vmatmul.f32.gmra.mxu0 %v880
    %v906 = vpop.f32.mrf.mxu0
    %v907 = vadd.f32 0.0, %v906
    %908 = vdwg.mxu0
    %v909 = vsel %vm412, %v439, -inf
    %910 = vmax.xlane.f32.xlu0 %v909
    %v911 = vpop.xlane.xlu0 %910
    %v912 = vsel %vm412, %v442, -inf
    %913 = vmax.xlane.f32.xlu0 %v912
    %v914 = vpop.xlane.xlu0 %913
    %v915 = vsel %vm412, %v470, -inf
    %916 = vmax.xlane.f32.xlu0 %v915
    %v917 = vpop.xlane.xlu0 %916
    %v918 = vsel %vm412, %v473, -inf
    %919 = vmax.xlane.f32.xlu0 %v918
    %v920 = vpop.xlane.xlu0 %919
    %v921 = vsel %vm412, %v501, -inf
    %922 = vmax.xlane.f32.xlu0 %v921
    %v923 = vpop.xlane.xlu0 %922
    %v924 = vsel %vm412, %v504, -inf
    %925 = vmax.xlane.f32.xlu0 %v924
    %v926 = vpop.xlane.xlu0 %925
    %v927 = vsel %vm412, %v532, -inf
    %928 = vmax.xlane.f32.xlu0 %v927
    %v929 = vpop.xlane.xlu0 %928
    %v930 = vsel %vm412, %v535, -inf
    %931 = vmax.xlane.f32.xlu0 %v930
    %v932 = vpop.xlane.xlu0 %931
    %v933 = vsel %vm412, %v563, -inf
    %934 = vmax.xlane.f32.xlu0 %v933
    %v935 = vpop.xlane.xlu0 %934
    %v936 = vsel %vm412, %v566, -inf
    %937 = vmax.xlane.f32.xlu0 %v936
    %v938 = vpop.xlane.xlu0 %937
    %v939 = vsel %vm412, %v594, -inf
    %940 = vmax.xlane.f32.xlu0 %v939
    %v941 = vpop.xlane.xlu0 %940
    %v942 = vsel %vm412, %v597, -inf
    %943 = vmax.xlane.f32.xlu0 %v942
    %v944 = vpop.xlane.xlu0 %943
    %v945 = vsel %vm412, %v625, -inf
    %946 = vmax.xlane.f32.xlu0 %v945
    %v947 = vpop.xlane.xlu0 %946
    %v948 = vsel %vm412, %v628, -inf
    %949 = vmax.xlane.f32.xlu0 %v948
    %v950 = vpop.xlane.xlu0 %949
    %v951 = vsel %vm412, %v656, -inf
    %952 = vmax.xlane.f32.xlu0 %v951
    %v953 = vpop.xlane.xlu0 %952
    %v954 = vsel %vm412, %v659, -inf
    %955 = vmax.xlane.f32.xlu0 %v954
    %v956 = vpop.xlane.xlu0 %955
    %v957 = vsel %vm412, %v687, -inf
    %958 = vmax.xlane.f32.xlu0 %v957
    %v959 = vpop.xlane.xlu0 %958
    %v960 = vsel %vm412, %v690, -inf
    %961 = vmax.xlane.f32.xlu0 %v960
    %v962 = vpop.xlane.xlu0 %961
    %v963 = vsel %vm412, %v718, -inf
    %964 = vmax.xlane.f32.xlu0 %v963
    %v965 = vpop.xlane.xlu0 %964
    %v966 = vsel %vm412, %v721, -inf
    %967 = vmax.xlane.f32.xlu0 %v966
    %v968 = vpop.xlane.xlu0 %967
    %v969 = vsel %vm412, %v749, -inf
    %970 = vmax.xlane.f32.xlu0 %v969
    %v971 = vpop.xlane.xlu0 %970
    %v972 = vsel %vm412, %v752, -inf
    %973 = vmax.xlane.f32.xlu0 %v972
    %v974 = vpop.xlane.xlu0 %973
    %v975 = vsel %vm412, %v780, -inf
    %976 = vmax.xlane.f32.xlu0 %v975
    %v977 = vpop.xlane.xlu0 %976
    %v978 = vsel %vm412, %v783, -inf
    %979 = vmax.xlane.f32.xlu0 %v978
    %v980 = vpop.xlane.xlu0 %979
    %v981 = vsel %vm412, %v811, -inf
    %982 = vmax.xlane.f32.xlu0 %v981
    %v983 = vpop.xlane.xlu0 %982
    %v984 = vsel %vm412, %v814, -inf
    %985 = vmax.xlane.f32.xlu0 %v984
    %v986 = vpop.xlane.xlu0 %985
    %v987 = vsel %vm412, %v842, -inf
    %988 = vmax.xlane.f32.xlu0 %v987
    %v989 = vpop.xlane.xlu0 %988
    %v990 = vsel %vm412, %v845, -inf
    %991 = vmax.xlane.f32.xlu0 %v990
    %v992 = vpop.xlane.xlu0 %991
    %v993 = vsel %vm412, %v873, -inf
    %994 = vmax.xlane.f32.xlu0 %v993
    %v995 = vpop.xlane.xlu0 %994
    %v996 = vsel %vm412, %v876, -inf
    %997 = vmax.xlane.f32.xlu0 %v996
    %v998 = vpop.xlane.xlu0 %997
    %v999 = vsel %vm412, %v904, -inf
    %1000 = vmax.xlane.f32.xlu0 %v999
    %v1001 = vpop.xlane.xlu0 %1000
    %v1002 = vsel %vm412, %v907, -inf
    %1003 = vmax.xlane.f32.xlu0 %v1002
    %v1004 = vpop.xlane.xlu0 %1003
    %v1005 = vsub.f32 %v439, %v911
    %v1006 = vsub.f32 %v442, %v914
    %v1007 = vsub.f32 %v470, %v917
    %v1008 = vsub.f32 %v473, %v920
    %v1009 = vsub.f32 %v501, %v923
    %v1010 = vsub.f32 %v504, %v926
    %v1011 = vsub.f32 %v532, %v929
    %v1012 = vsub.f32 %v535, %v932
    %v1013 = vsub.f32 %v563, %v935
    %v1014 = vsub.f32 %v566, %v938
    %v1015 = vsub.f32 %v594, %v941
    %v1016 = vsub.f32 %v597, %v944
    %v1017 = vsub.f32 %v625, %v947
    %v1018 = vsub.f32 %v628, %v950
    %v1019 = vsub.f32 %v656, %v953
    %v1020 = vsub.f32 %v659, %v956
    %v1021 = vsub.f32 %v687, %v959
    %v1022 = vsub.f32 %v690, %v962
    %v1023 = vsub.f32 %v718, %v965
    %v1024 = vsub.f32 %v721, %v968
    %v1025 = vsub.f32 %v749, %v971
    %v1026 = vsub.f32 %v752, %v974
    %v1027 = vsub.f32 %v780, %v977
    %v1028 = vsub.f32 %v783, %v980
    %v1029 = vsub.f32 %v811, %v983
    %v1030 = vsub.f32 %v814, %v986
    %v1031 = vsub.f32 %v842, %v989
    %v1032 = vsub.f32 %v845, %v992
    %v1033 = vsub.f32 %v873, %v995
    %v1034 = vsub.f32 %v876, %v998
    %v1035 = vsub.f32 %v904, %v1001
    %v1036 = vsub.f32 %v907, %v1004
    %v1037 = vmul.f32 %v1005, 1.442695
    %v1038 = vpow.pop %v1037
    %v1039 = vmul.f32 %v1006, 1.442695
    %v1040 = vpow.pop %v1039
    %v1041 = vmul.f32 %v1007, 1.442695
    %v1042 = vpow.pop %v1041
    %v1043 = vmul.f32 %v1008, 1.442695
    %v1044 = vpow.pop %v1043
    %v1045 = vmul.f32 %v1009, 1.442695
    %v1046 = vpow.pop %v1045
    %v1047 = vmul.f32 %v1010, 1.442695
    %v1048 = vpow.pop %v1047
    %v1049 = vmul.f32 %v1011, 1.442695
    %v1050 = vpow.pop %v1049
    %v1051 = vmul.f32 %v1012, 1.442695
    %v1052 = vpow.pop %v1051
    %v1053 = vmul.f32 %v1013, 1.442695
    %v1054 = vpow.pop %v1053
    %v1055 = vmul.f32 %v1014, 1.442695
    %v1056 = vpow.pop %v1055
    %v1057 = vmul.f32 %v1015, 1.442695
    %v1058 = vpow.pop %v1057
    %v1059 = vmul.f32 %v1016, 1.442695
    %v1060 = vpow.pop %v1059
    %v1061 = vmul.f32 %v1017, 1.442695
    %v1062 = vpow.pop %v1061
    %v1063 = vmul.f32 %v1018, 1.442695
    %v1064 = vpow.pop %v1063
    %v1065 = vmul.f32 %v1019, 1.442695
    %v1066 = vpow.pop %v1065
    %v1067 = vmul.f32 %v1020, 1.442695
    %v1068 = vpow.pop %v1067
    %v1069 = vmul.f32 %v1021, 1.442695
    %v1070 = vpow.pop %v1069
    %v1071 = vmul.f32 %v1022, 1.442695
    %v1072 = vpow.pop %v1071
    %v1073 = vmul.f32 %v1023, 1.442695
    %v1074 = vpow.pop %v1073
    %v1075 = vmul.f32 %v1024, 1.442695
    %v1076 = vpow.pop %v1075
    %v1077 = vmul.f32 %v1025, 1.442695
    %v1078 = vpow.pop %v1077
    %v1079 = vmul.f32 %v1026, 1.442695
    %v1080 = vpow.pop %v1079
    %v1081 = vmul.f32 %v1027, 1.442695
    %v1082 = vpow.pop %v1081
    %v1083 = vmul.f32 %v1028, 1.442695
    %v1084 = vpow.pop %v1083
    %v1085 = vmul.f32 %v1029, 1.442695
    %v1086 = vpow.pop %v1085
    %v1087 = vmul.f32 %v1030, 1.442695
    %v1088 = vpow.pop %v1087
    %v1089 = vmul.f32 %v1031, 1.442695
    %v1090 = vpow.pop %v1089
    %v1091 = vmul.f32 %v1032, 1.442695
    %v1092 = vpow.pop %v1091
    %v1093 = vmul.f32 %v1033, 1.442695
    %v1094 = vpow.pop %v1093
    %v1095 = vmul.f32 %v1034, 1.442695
    %v1096 = vpow.pop %v1095
    %v1097 = vmul.f32 %v1035, 1.442695
    %v1098 = vpow.pop %v1097
    %v1099 = vmul.f32 %v1036, 1.442695
    %v1100 = vpow.pop %v1099
    %v1101 = vsel %vm412, %v1038, 0.0
    %1102 = vadd.xlane.f32.xlu0 %v1101
    %v1103 = vpop.xlane.xlu0 %1102
    %v1104 = vsel %vm412, %v1040, 0.0
    %1105 = vadd.xlane.f32.xlu0 %v1104
    %v1106 = vpop.xlane.xlu0 %1105
    %v1107 = vsel %vm412, %v1042, 0.0
    %1108 = vadd.xlane.f32.xlu0 %v1107
    %v1109 = vpop.xlane.xlu0 %1108
    %v1110 = vsel %vm412, %v1044, 0.0
    %1111 = vadd.xlane.f32.xlu0 %v1110
    %v1112 = vpop.xlane.xlu0 %1111
    %v1113 = vsel %vm412, %v1046, 0.0
    %1114 = vadd.xlane.f32.xlu0 %v1113
    %v1115 = vpop.xlane.xlu0 %1114
    %v1116 = vsel %vm412, %v1048, 0.0
    %1117 = vadd.xlane.f32.xlu0 %v1116
    %v1118 = vpop.xlane.xlu0 %1117
    %v1119 = vsel %vm412, %v1050, 0.0
    %1120 = vadd.xlane.f32.xlu0 %v1119
    %v1121 = vpop.xlane.xlu0 %1120
    %v1122 = vsel %vm412, %v1052, 0.0
    %1123 = vadd.xlane.f32.xlu0 %v1122
    %v1124 = vpop.xlane.xlu0 %1123
    %v1125 = vsel %vm412, %v1054, 0.0
    %1126 = vadd.xlane.f32.xlu0 %v1125
    %v1127 = vpop.xlane.xlu0 %1126
    %v1128 = vsel %vm412, %v1056, 0.0
    %1129 = vadd.xlane.f32.xlu0 %v1128
    %v1130 = vpop.xlane.xlu0 %1129
    %v1131 = vsel %vm412, %v1058, 0.0
    %1132 = vadd.xlane.f32.xlu0 %v1131
    %v1133 = vpop.xlane.xlu0 %1132
    %v1134 = vsel %vm412, %v1060, 0.0
    %1135 = vadd.xlane.f32.xlu0 %v1134
    %v1136 = vpop.xlane.xlu0 %1135
    %v1137 = vsel %vm412, %v1062, 0.0
    %1138 = vadd.xlane.f32.xlu0 %v1137
    %v1139 = vpop.xlane.xlu0 %1138
    %v1140 = vsel %vm412, %v1064, 0.0
    %1141 = vadd.xlane.f32.xlu0 %v1140
    %v1142 = vpop.xlane.xlu0 %1141
    %v1143 = vsel %vm412, %v1066, 0.0
    %1144 = vadd.xlane.f32.xlu0 %v1143
    %v1145 = vpop.xlane.xlu0 %1144
    %v1146 = vsel %vm412, %v1068, 0.0
    %1147 = vadd.xlane.f32.xlu0 %v1146
    %v1148 = vpop.xlane.xlu0 %1147
    %v1149 = vsel %vm412, %v1070, 0.0
    %1150 = vadd.xlane.f32.xlu0 %v1149
    %v1151 = vpop.xlane.xlu0 %1150
    %v1152 = vsel %vm412, %v1072, 0.0
    %1153 = vadd.xlane.f32.xlu0 %v1152
    %v1154 = vpop.xlane.xlu0 %1153
    %v1155 = vsel %vm412, %v1074, 0.0
    %1156 = vadd.xlane.f32.xlu0 %v1155
    %v1157 = vpop.xlane.xlu0 %1156
    %v1158 = vsel %vm412, %v1076, 0.0
    %1159 = vadd.xlane.f32.xlu0 %v1158
    %v1160 = vpop.xlane.xlu0 %1159
    %v1161 = vsel %vm412, %v1078, 0.0
    %1162 = vadd.xlane.f32.xlu0 %v1161
    %v1163 = vpop.xlane.xlu0 %1162
    %v1164 = vsel %vm412, %v1080, 0.0
    %1165 = vadd.xlane.f32.xlu0 %v1164
    %v1166 = vpop.xlane.xlu0 %1165
    %v1167 = vsel %vm412, %v1082, 0.0
    %1168 = vadd.xlane.f32.xlu0 %v1167
    %v1169 = vpop.xlane.xlu0 %1168
    %v1170 = vsel %vm412, %v1084, 0.0
    %1171 = vadd.xlane.f32.xlu0 %v1170
    %v1172 = vpop.xlane.xlu0 %1171
    %v1173 = vsel %vm412, %v1086, 0.0
    %1174 = vadd.xlane.f32.xlu0 %v1173
    %v1175 = vpop.xlane.xlu0 %1174
    %v1176 = vsel %vm412, %v1088, 0.0
    %1177 = vadd.xlane.f32.xlu0 %v1176
    %v1178 = vpop.xlane.xlu0 %1177
    %v1179 = vsel %vm412, %v1090, 0.0
    %1180 = vadd.xlane.f32.xlu0 %v1179
    %v1181 = vpop.xlane.xlu0 %1180
    %v1182 = vsel %vm412, %v1092, 0.0
    %1183 = vadd.xlane.f32.xlu0 %v1182
    %v1184 = vpop.xlane.xlu0 %1183
    %v1185 = vsel %vm412, %v1094, 0.0
    %1186 = vadd.xlane.f32.xlu0 %v1185
    %v1187 = vpop.xlane.xlu0 %1186
    %v1188 = vsel %vm412, %v1096, 0.0
    %1189 = vadd.xlane.f32.xlu0 %v1188
    %v1190 = vpop.xlane.xlu0 %1189
    %v1191 = vsel %vm412, %v1098, 0.0
    %1192 = vadd.xlane.f32.xlu0 %v1191
    %v1193 = vpop.xlane.xlu0 %1192
    %v1194 = vsel %vm412, %v1100, 0.0
    %1195 = vadd.xlane.f32.xlu0 %v1194
    %v1196 = vpop.xlane.xlu0 %1195
    %v1197 = vrcp.pop %v1103
    %v1198 = vmul.f32 %v1103, %v1197
    %v1199 = vsub.f32 1.0, %v1198
    %v1200 = vmul.f32 %v1197, %v1199
    %v1201 = vadd.f32 %v1197, %v1200
    %vm1202 = vweird.f32 %v1103
    %vm1203 = vweird.f32 %v1197
    %vm1204 = vmor %vm1202, %vm1203
    %v1205 = vsel %vm1204, %v1197, %v1201
    %v1206 = vand.u32 2147483647, %v1103
    %vm1207 = vcmp.eq.f32.partialorder %v1206, 8.507059e+37
    %v1208 = vand.u32 %v1103, 2147483648
    %v1209 = vor.u32 1.1754944e-38, %v1208
    %v1210 = vsel %vm1207, %v1209, %v1205
    %v1211 = vrcp.pop %v1106
    %v1212 = vmul.f32 %v1106, %v1211
    %v1213 = vsub.f32 1.0, %v1212
    %v1214 = vmul.f32 %v1211, %v1213
    %v1215 = vadd.f32 %v1211, %v1214
    %vm1216 = vweird.f32 %v1106
    %vm1217 = vweird.f32 %v1211
    %vm1218 = vmor %vm1216, %vm1217
    %v1219 = vsel %vm1218, %v1211, %v1215
    %v1220 = vand.u32 2147483647, %v1106
    %vm1221 = vcmp.eq.f32.partialorder %v1220, 8.507059e+37
    %v1222 = vand.u32 %v1106, 2147483648
    %v1223 = vor.u32 1.1754944e-38, %v1222
    %v1224 = vsel %vm1221, %v1223, %v1219
    %v1225 = vrcp.pop %v1109
    %v1226 = vmul.f32 %v1109, %v1225
    %v1227 = vsub.f32 1.0, %v1226
    %v1228 = vmul.f32 %v1225, %v1227
    %v1229 = vadd.f32 %v1225, %v1228
    %vm1230 = vweird.f32 %v1109
    %vm1231 = vweird.f32 %v1225
    %vm1232 = vmor %vm1230, %vm1231
    %v1233 = vsel %vm1232, %v1225, %v1229
    %v1234 = vand.u32 2147483647, %v1109
    %vm1235 = vcmp.eq.f32.partialorder %v1234, 8.507059e+37
    %v1236 = vand.u32 %v1109, 2147483648
    %v1237 = vor.u32 1.1754944e-38, %v1236
    %v1238 = vsel %vm1235, %v1237, %v1233
    %v1239 = vrcp.pop %v1112
    %v1240 = vmul.f32 %v1112, %v1239
    %v1241 = vsub.f32 1.0, %v1240
    %v1242 = vmul.f32 %v1239, %v1241
    %v1243 = vadd.f32 %v1239, %v1242
    %vm1244 = vweird.f32 %v1112
    %vm1245 = vweird.f32 %v1239
    %vm1246 = vmor %vm1244, %vm1245
    %v1247 = vsel %vm1246, %v1239, %v1243
    %v1248 = vand.u32 2147483647, %v1112
    %vm1249 = vcmp.eq.f32.partialorder %v1248, 8.507059e+37
    %v1250 = vand.u32 %v1112, 2147483648
    %v1251 = vor.u32 1.1754944e-38, %v1250
    %v1252 = vsel %vm1249, %v1251, %v1247
    %v1253 = vrcp.pop %v1115
    %v1254 = vmul.f32 %v1115, %v1253
    %v1255 = vsub.f32 1.0, %v1254
    %v1256 = vmul.f32 %v1253, %v1255
    %v1257 = vadd.f32 %v1253, %v1256
    %vm1258 = vweird.f32 %v1115
    %vm1259 = vweird.f32 %v1253
    %vm1260 = vmor %vm1258, %vm1259
    %v1261 = vsel %vm1260, %v1253, %v1257
    %v1262 = vand.u32 2147483647, %v1115
    %vm1263 = vcmp.eq.f32.partialorder %v1262, 8.507059e+37
    %v1264 = vand.u32 %v1115, 2147483648
    %v1265 = vor.u32 1.1754944e-38, %v1264
    %v1266 = vsel %vm1263, %v1265, %v1261
    %v1267 = vrcp.pop %v1118
    %v1268 = vmul.f32 %v1118, %v1267
    %v1269 = vsub.f32 1.0, %v1268
    %v1270 = vmul.f32 %v1267, %v1269
    %v1271 = vadd.f32 %v1267, %v1270
    %vm1272 = vweird.f32 %v1118
    %vm1273 = vweird.f32 %v1267
    %vm1274 = vmor %vm1272, %vm1273
    %v1275 = vsel %vm1274, %v1267, %v1271
    %v1276 = vand.u32 2147483647, %v1118
    %vm1277 = vcmp.eq.f32.partialorder %v1276, 8.507059e+37
    %v1278 = vand.u32 %v1118, 2147483648
    %v1279 = vor.u32 1.1754944e-38, %v1278
    %v1280 = vsel %vm1277, %v1279, %v1275
    %v1281 = vrcp.pop %v1121
    %v1282 = vmul.f32 %v1121, %v1281
    %v1283 = vsub.f32 1.0, %v1282
    %v1284 = vmul.f32 %v1281, %v1283
    %v1285 = vadd.f32 %v1281, %v1284
    %vm1286 = vweird.f32 %v1121
    %vm1287 = vweird.f32 %v1281
    %vm1288 = vmor %vm1286, %vm1287
    %v1289 = vsel %vm1288, %v1281, %v1285
    %v1290 = vand.u32 2147483647, %v1121
    %vm1291 = vcmp.eq.f32.partialorder %v1290, 8.507059e+37
    %v1292 = vand.u32 %v1121, 2147483648
    %v1293 = vor.u32 1.1754944e-38, %v1292
    %v1294 = vsel %vm1291, %v1293, %v1289
    %v1295 = vrcp.pop %v1124
    %v1296 = vmul.f32 %v1124, %v1295
    %v1297 = vsub.f32 1.0, %v1296
    %v1298 = vmul.f32 %v1295, %v1297
    %v1299 = vadd.f32 %v1295, %v1298
    %vm1300 = vweird.f32 %v1124
    %vm1301 = vweird.f32 %v1295
    %vm1302 = vmor %vm1300, %vm1301
    %v1303 = vsel %vm1302, %v1295, %v1299
    %v1304 = vand.u32 2147483647, %v1124
    %vm1305 = vcmp.eq.f32.partialorder %v1304, 8.507059e+37
    %v1306 = vand.u32 %v1124, 2147483648
    %v1307 = vor.u32 1.1754944e-38, %v1306
    %v1308 = vsel %vm1305, %v1307, %v1303
    %v1309 = vrcp.pop %v1127
    %v1310 = vmul.f32 %v1127, %v1309
    %v1311 = vsub.f32 1.0, %v1310
    %v1312 = vmul.f32 %v1309, %v1311
    %v1313 = vadd.f32 %v1309, %v1312
    %vm1314 = vweird.f32 %v1127
    %vm1315 = vweird.f32 %v1309
    %vm1316 = vmor %vm1314, %vm1315
    %v1317 = vsel %vm1316, %v1309, %v1313
    %v1318 = vand.u32 2147483647, %v1127
    %vm1319 = vcmp.eq.f32.partialorder %v1318, 8.507059e+37
    %v1320 = vand.u32 %v1127, 2147483648
    %v1321 = vor.u32 1.1754944e-38, %v1320
    %v1322 = vsel %vm1319, %v1321, %v1317
    %v1323 = vrcp.pop %v1130
    %v1324 = vmul.f32 %v1130, %v1323
    %v1325 = vsub.f32 1.0, %v1324
    %v1326 = vmul.f32 %v1323, %v1325
    %v1327 = vadd.f32 %v1323, %v1326
    %vm1328 = vweird.f32 %v1130
    %vm1329 = vweird.f32 %v1323
    %vm1330 = vmor %vm1328, %vm1329
    %v1331 = vsel %vm1330, %v1323, %v1327
    %v1332 = vand.u32 2147483647, %v1130
    %vm1333 = vcmp.eq.f32.partialorder %v1332, 8.507059e+37
    %v1334 = vand.u32 %v1130, 2147483648
    %v1335 = vor.u32 1.1754944e-38, %v1334
    %v1336 = vsel %vm1333, %v1335, %v1331
    %v1337 = vrcp.pop %v1133
    %v1338 = vmul.f32 %v1133, %v1337
    %v1339 = vsub.f32 1.0, %v1338
    %v1340 = vmul.f32 %v1337, %v1339
    %v1341 = vadd.f32 %v1337, %v1340
    %vm1342 = vweird.f32 %v1133
    %vm1343 = vweird.f32 %v1337
    %vm1344 = vmor %vm1342, %vm1343
    %v1345 = vsel %vm1344, %v1337, %v1341
    %v1346 = vand.u32 2147483647, %v1133
    %vm1347 = vcmp.eq.f32.partialorder %v1346, 8.507059e+37
    %v1348 = vand.u32 %v1133, 2147483648
    %v1349 = vor.u32 1.1754944e-38, %v1348
    %v1350 = vsel %vm1347, %v1349, %v1345
    %v1351 = vrcp.pop %v1136
    %v1352 = vmul.f32 %v1136, %v1351
    %v1353 = vsub.f32 1.0, %v1352
    %v1354 = vmul.f32 %v1351, %v1353
    %v1355 = vadd.f32 %v1351, %v1354
    %vm1356 = vweird.f32 %v1136
    %vm1357 = vweird.f32 %v1351
    %vm1358 = vmor %vm1356, %vm1357
    %v1359 = vsel %vm1358, %v1351, %v1355
    %v1360 = vand.u32 2147483647, %v1136
    %vm1361 = vcmp.eq.f32.partialorder %v1360, 8.507059e+37
    %v1362 = vand.u32 %v1136, 2147483648
    %v1363 = vor.u32 1.1754944e-38, %v1362
    %v1364 = vsel %vm1361, %v1363, %v1359
    %v1365 = vrcp.pop %v1139
    %v1366 = vmul.f32 %v1139, %v1365
    %v1367 = vsub.f32 1.0, %v1366
    %v1368 = vmul.f32 %v1365, %v1367
    %v1369 = vadd.f32 %v1365, %v1368
    %vm1370 = vweird.f32 %v1139
    %vm1371 = vweird.f32 %v1365
    %vm1372 = vmor %vm1370, %vm1371
    %v1373 = vsel %vm1372, %v1365, %v1369
    %v1374 = vand.u32 2147483647, %v1139
    %vm1375 = vcmp.eq.f32.partialorder %v1374, 8.507059e+37
    %v1376 = vand.u32 %v1139, 2147483648
    %v1377 = vor.u32 1.1754944e-38, %v1376
    %v1378 = vsel %vm1375, %v1377, %v1373
    %v1379 = vrcp.pop %v1142
    %v1380 = vmul.f32 %v1142, %v1379
    %v1381 = vsub.f32 1.0, %v1380
    %v1382 = vmul.f32 %v1379, %v1381
    %v1383 = vadd.f32 %v1379, %v1382
    %vm1384 = vweird.f32 %v1142
    %vm1385 = vweird.f32 %v1379
    %vm1386 = vmor %vm1384, %vm1385
    %v1387 = vsel %vm1386, %v1379, %v1383
    %v1388 = vand.u32 2147483647, %v1142
    %vm1389 = vcmp.eq.f32.partialorder %v1388, 8.507059e+37
    %v1390 = vand.u32 %v1142, 2147483648
    %v1391 = vor.u32 1.1754944e-38, %v1390
    %v1392 = vsel %vm1389, %v1391, %v1387
    %v1393 = vrcp.pop %v1145
    %v1394 = vmul.f32 %v1145, %v1393
    %v1395 = vsub.f32 1.0, %v1394
    %v1396 = vmul.f32 %v1393, %v1395
    %v1397 = vadd.f32 %v1393, %v1396
    %vm1398 = vweird.f32 %v1145
    %vm1399 = vweird.f32 %v1393
    %vm1400 = vmor %vm1398, %vm1399
    %v1401 = vsel %vm1400, %v1393, %v1397
    %v1402 = vand.u32 2147483647, %v1145
    %vm1403 = vcmp.eq.f32.partialorder %v1402, 8.507059e+37
    %v1404 = vand.u32 %v1145, 2147483648
    %v1405 = vor.u32 1.1754944e-38, %v1404
    %v1406 = vsel %vm1403, %v1405, %v1401
    %v1407 = vrcp.pop %v1148
    %v1408 = vmul.f32 %v1148, %v1407
    %v1409 = vsub.f32 1.0, %v1408
    %v1410 = vmul.f32 %v1407, %v1409
    %v1411 = vadd.f32 %v1407, %v1410
    %vm1412 = vweird.f32 %v1148
    %vm1413 = vweird.f32 %v1407
    %vm1414 = vmor %vm1412, %vm1413
    %v1415 = vsel %vm1414, %v1407, %v1411
    %v1416 = vand.u32 2147483647, %v1148
    %vm1417 = vcmp.eq.f32.partialorder %v1416, 8.507059e+37
    %v1418 = vand.u32 %v1148, 2147483648
    %v1419 = vor.u32 1.1754944e-38, %v1418
    %v1420 = vsel %vm1417, %v1419, %v1415
    %v1421 = vrcp.pop %v1151
    %v1422 = vmul.f32 %v1151, %v1421
    %v1423 = vsub.f32 1.0, %v1422
    %v1424 = vmul.f32 %v1421, %v1423
    %v1425 = vadd.f32 %v1421, %v1424
    %vm1426 = vweird.f32 %v1151
    %vm1427 = vweird.f32 %v1421
    %vm1428 = vmor %vm1426, %vm1427
    %v1429 = vsel %vm1428, %v1421, %v1425
    %v1430 = vand.u32 2147483647, %v1151
    %vm1431 = vcmp.eq.f32.partialorder %v1430, 8.507059e+37
    %v1432 = vand.u32 %v1151, 2147483648
    %v1433 = vor.u32 1.1754944e-38, %v1432
    %v1434 = vsel %vm1431, %v1433, %v1429
    %v1435 = vrcp.pop %v1154
    %v1436 = vmul.f32 %v1154, %v1435
    %v1437 = vsub.f32 1.0, %v1436
    %v1438 = vmul.f32 %v1435, %v1437
    %v1439 = vadd.f32 %v1435, %v1438
    %vm1440 = vweird.f32 %v1154
    %vm1441 = vweird.f32 %v1435
    %vm1442 = vmor %vm1440, %vm1441
    %v1443 = vsel %vm1442, %v1435, %v1439
    %v1444 = vand.u32 2147483647, %v1154
    %vm1445 = vcmp.eq.f32.partialorder %v1444, 8.507059e+37
    %v1446 = vand.u32 %v1154, 2147483648
    %v1447 = vor.u32 1.1754944e-38, %v1446
    %v1448 = vsel %vm1445, %v1447, %v1443
    %v1449 = vrcp.pop %v1157
    %v1450 = vmul.f32 %v1157, %v1449
    %v1451 = vsub.f32 1.0, %v1450
    %v1452 = vmul.f32 %v1449, %v1451
    %v1453 = vadd.f32 %v1449, %v1452
    %vm1454 = vweird.f32 %v1157
    %vm1455 = vweird.f32 %v1449
    %vm1456 = vmor %vm1454, %vm1455
    %v1457 = vsel %vm1456, %v1449, %v1453
    %v1458 = vand.u32 2147483647, %v1157
    %vm1459 = vcmp.eq.f32.partialorder %v1458, 8.507059e+37
    %v1460 = vand.u32 %v1157, 2147483648
    %v1461 = vor.u32 1.1754944e-38, %v1460
    %v1462 = vsel %vm1459, %v1461, %v1457
    %v1463 = vrcp.pop %v1160
    %v1464 = vmul.f32 %v1160, %v1463
    %v1465 = vsub.f32 1.0, %v1464
    %v1466 = vmul.f32 %v1463, %v1465
    %v1467 = vadd.f32 %v1463, %v1466
    %vm1468 = vweird.f32 %v1160
    %vm1469 = vweird.f32 %v1463
    %vm1470 = vmor %vm1468, %vm1469
    %v1471 = vsel %vm1470, %v1463, %v1467
    %v1472 = vand.u32 2147483647, %v1160
    %vm1473 = vcmp.eq.f32.partialorder %v1472, 8.507059e+37
    %v1474 = vand.u32 %v1160, 2147483648
    %v1475 = vor.u32 1.1754944e-38, %v1474
    %v1476 = vsel %vm1473, %v1475, %v1471
    %v1477 = vrcp.pop %v1163
    %v1478 = vmul.f32 %v1163, %v1477
    %v1479 = vsub.f32 1.0, %v1478
    %v1480 = vmul.f32 %v1477, %v1479
    %v1481 = vadd.f32 %v1477, %v1480
    %vm1482 = vweird.f32 %v1163
    %vm1483 = vweird.f32 %v1477
    %vm1484 = vmor %vm1482, %vm1483
    %v1485 = vsel %vm1484, %v1477, %v1481
    %v1486 = vand.u32 2147483647, %v1163
    %vm1487 = vcmp.eq.f32.partialorder %v1486, 8.507059e+37
    %v1488 = vand.u32 %v1163, 2147483648
    %v1489 = vor.u32 1.1754944e-38, %v1488
    %v1490 = vsel %vm1487, %v1489, %v1485
    %v1491 = vrcp.pop %v1166
    %v1492 = vmul.f32 %v1166, %v1491
    %v1493 = vsub.f32 1.0, %v1492
    %v1494 = vmul.f32 %v1491, %v1493
    %v1495 = vadd.f32 %v1491, %v1494
    %vm1496 = vweird.f32 %v1166
    %vm1497 = vweird.f32 %v1491
    %vm1498 = vmor %vm1496, %vm1497
    %v1499 = vsel %vm1498, %v1491, %v1495
    %v1500 = vand.u32 2147483647, %v1166
    %vm1501 = vcmp.eq.f32.partialorder %v1500, 8.507059e+37
    %v1502 = vand.u32 %v1166, 2147483648
    %v1503 = vor.u32 1.1754944e-38, %v1502
    %v1504 = vsel %vm1501, %v1503, %v1499
    %v1505 = vrcp.pop %v1169
    %v1506 = vmul.f32 %v1169, %v1505
    %v1507 = vsub.f32 1.0, %v1506
    %v1508 = vmul.f32 %v1505, %v1507
    %v1509 = vadd.f32 %v1505, %v1508
    %vm1510 = vweird.f32 %v1169
    %vm1511 = vweird.f32 %v1505
    %vm1512 = vmor %vm1510, %vm1511
    %v1513 = vsel %vm1512, %v1505, %v1509
    %v1514 = vand.u32 2147483647, %v1169
    %vm1515 = vcmp.eq.f32.partialorder %v1514, 8.507059e+37
    %v1516 = vand.u32 %v1169, 2147483648
    %v1517 = vor.u32 1.1754944e-38, %v1516
    %v1518 = vsel %vm1515, %v1517, %v1513
    %v1519 = vrcp.pop %v1172
    %v1520 = vmul.f32 %v1172, %v1519
    %v1521 = vsub.f32 1.0, %v1520
    %v1522 = vmul.f32 %v1519, %v1521
    %v1523 = vadd.f32 %v1519, %v1522
    %vm1524 = vweird.f32 %v1172
    %vm1525 = vweird.f32 %v1519
    %vm1526 = vmor %vm1524, %vm1525
    %v1527 = vsel %vm1526, %v1519, %v1523
    %v1528 = vand.u32 2147483647, %v1172
    %vm1529 = vcmp.eq.f32.partialorder %v1528, 8.507059e+37
    %v1530 = vand.u32 %v1172, 2147483648
    %v1531 = vor.u32 1.1754944e-38, %v1530
    %v1532 = vsel %vm1529, %v1531, %v1527
    %v1533 = vrcp.pop %v1175
    %v1534 = vmul.f32 %v1175, %v1533
    %v1535 = vsub.f32 1.0, %v1534
    %v1536 = vmul.f32 %v1533, %v1535
    %v1537 = vadd.f32 %v1533, %v1536
    %vm1538 = vweird.f32 %v1175
    %vm1539 = vweird.f32 %v1533
    %vm1540 = vmor %vm1538, %vm1539
    %v1541 = vsel %vm1540, %v1533, %v1537
    %v1542 = vand.u32 2147483647, %v1175
    %vm1543 = vcmp.eq.f32.partialorder %v1542, 8.507059e+37
    %v1544 = vand.u32 %v1175, 2147483648
    %v1545 = vor.u32 1.1754944e-38, %v1544
    %v1546 = vsel %vm1543, %v1545, %v1541
    %v1547 = vrcp.pop %v1178
    %v1548 = vmul.f32 %v1178, %v1547
    %v1549 = vsub.f32 1.0, %v1548
    %v1550 = vmul.f32 %v1547, %v1549
    %v1551 = vadd.f32 %v1547, %v1550
    %vm1552 = vweird.f32 %v1178
    %vm1553 = vweird.f32 %v1547
    %vm1554 = vmor %vm1552, %vm1553
    %v1555 = vsel %vm1554, %v1547, %v1551
    %v1556 = vand.u32 2147483647, %v1178
    %vm1557 = vcmp.eq.f32.partialorder %v1556, 8.507059e+37
    %v1558 = vand.u32 %v1178, 2147483648
    %v1559 = vor.u32 1.1754944e-38, %v1558
    %v1560 = vsel %vm1557, %v1559, %v1555
    %v1561 = vrcp.pop %v1181
    %v1562 = vmul.f32 %v1181, %v1561
    %v1563 = vsub.f32 1.0, %v1562
    %v1564 = vmul.f32 %v1561, %v1563
    %v1565 = vadd.f32 %v1561, %v1564
    %vm1566 = vweird.f32 %v1181
    %vm1567 = vweird.f32 %v1561
    %vm1568 = vmor %vm1566, %vm1567
    %v1569 = vsel %vm1568, %v1561, %v1565
    %v1570 = vand.u32 2147483647, %v1181
    %vm1571 = vcmp.eq.f32.partialorder %v1570, 8.507059e+37
    %v1572 = vand.u32 %v1181, 2147483648
    %v1573 = vor.u32 1.1754944e-38, %v1572
    %v1574 = vsel %vm1571, %v1573, %v1569
    %v1575 = vrcp.pop %v1184
    %v1576 = vmul.f32 %v1184, %v1575
    %v1577 = vsub.f32 1.0, %v1576
    %v1578 = vmul.f32 %v1575, %v1577
    %v1579 = vadd.f32 %v1575, %v1578
    %vm1580 = vweird.f32 %v1184
    %vm1581 = vweird.f32 %v1575
    %vm1582 = vmor %vm1580, %vm1581
    %v1583 = vsel %vm1582, %v1575, %v1579
    %v1584 = vand.u32 2147483647, %v1184
    %vm1585 = vcmp.eq.f32.partialorder %v1584, 8.507059e+37
    %v1586 = vand.u32 %v1184, 2147483648
    %v1587 = vor.u32 1.1754944e-38, %v1586
    %v1588 = vsel %vm1585, %v1587, %v1583
    %v1589 = vrcp.pop %v1187
    %v1590 = vmul.f32 %v1187, %v1589
    %v1591 = vsub.f32 1.0, %v1590
    %v1592 = vmul.f32 %v1589, %v1591
    %v1593 = vadd.f32 %v1589, %v1592
    %vm1594 = vweird.f32 %v1187
    %vm1595 = vweird.f32 %v1589
    %vm1596 = vmor %vm1594, %vm1595
    %v1597 = vsel %vm1596, %v1589, %v1593
    %v1598 = vand.u32 2147483647, %v1187
    %vm1599 = vcmp.eq.f32.partialorder %v1598, 8.507059e+37
    %v1600 = vand.u32 %v1187, 2147483648
    %v1601 = vor.u32 1.1754944e-38, %v1600
    %v1602 = vsel %vm1599, %v1601, %v1597
    %v1603 = vrcp.pop %v1190
    %v1604 = vmul.f32 %v1190, %v1603
    %v1605 = vsub.f32 1.0, %v1604
    %v1606 = vmul.f32 %v1603, %v1605
    %v1607 = vadd.f32 %v1603, %v1606
    %vm1608 = vweird.f32 %v1190
    %vm1609 = vweird.f32 %v1603
    %vm1610 = vmor %vm1608, %vm1609
    %v1611 = vsel %vm1610, %v1603, %v1607
    %v1612 = vand.u32 2147483647, %v1190
    %vm1613 = vcmp.eq.f32.partialorder %v1612, 8.507059e+37
    %v1614 = vand.u32 %v1190, 2147483648
    %v1615 = vor.u32 1.1754944e-38, %v1614
    %v1616 = vsel %vm1613, %v1615, %v1611
    %v1617 = vrcp.pop %v1193
    %v1618 = vmul.f32 %v1193, %v1617
    %v1619 = vsub.f32 1.0, %v1618
    %v1620 = vmul.f32 %v1617, %v1619
    %v1621 = vadd.f32 %v1617, %v1620
    %vm1622 = vweird.f32 %v1193
    %vm1623 = vweird.f32 %v1617
    %vm1624 = vmor %vm1622, %vm1623
    %v1625 = vsel %vm1624, %v1617, %v1621
    %v1626 = vand.u32 2147483647, %v1193
    %vm1627 = vcmp.eq.f32.partialorder %v1626, 8.507059e+37
    %v1628 = vand.u32 %v1193, 2147483648
    %v1629 = vor.u32 1.1754944e-38, %v1628
    %v1630 = vsel %vm1627, %v1629, %v1625
    %v1631 = vrcp.pop %v1196
    %v1632 = vmul.f32 %v1196, %v1631
    %v1633 = vsub.f32 1.0, %v1632
    %v1634 = vmul.f32 %v1631, %v1633
    %v1635 = vadd.f32 %v1631, %v1634
    %vm1636 = vweird.f32 %v1196
    %vm1637 = vweird.f32 %v1631
    %vm1638 = vmor %vm1636, %vm1637
    %v1639 = vsel %vm1638, %v1631, %v1635
    %v1640 = vand.u32 2147483647, %v1196
    %vm1641 = vcmp.eq.f32.partialorder %v1640, 8.507059e+37
    %v1642 = vand.u32 %v1196, 2147483648
    %v1643 = vor.u32 1.1754944e-38, %v1642
    %v1644 = vsel %vm1641, %v1643, %v1639
    %v1645 = vmul.f32 %v1038, %v1210
    %v1646 = vmul.f32 %v1040, %v1224
    %v1647 = vmul.f32 %v1042, %v1238
    %v1648 = vmul.f32 %v1044, %v1252
    %v1649 = vmul.f32 %v1046, %v1266
    %v1650 = vmul.f32 %v1048, %v1280
    %v1651 = vmul.f32 %v1050, %v1294
    %v1652 = vmul.f32 %v1052, %v1308
    %v1653 = vmul.f32 %v1054, %v1322
    %v1654 = vmul.f32 %v1056, %v1336
    %v1655 = vmul.f32 %v1058, %v1350
    %v1656 = vmul.f32 %v1060, %v1364
    %v1657 = vmul.f32 %v1062, %v1378
    %v1658 = vmul.f32 %v1064, %v1392
    %v1659 = vmul.f32 %v1066, %v1406
    %v1660 = vmul.f32 %v1068, %v1420
    %v1661 = vmul.f32 %v1070, %v1434
    %v1662 = vmul.f32 %v1072, %v1448
    %v1663 = vmul.f32 %v1074, %v1462
    %v1664 = vmul.f32 %v1076, %v1476
    %v1665 = vmul.f32 %v1078, %v1490
    %v1666 = vmul.f32 %v1080, %v1504
    %v1667 = vmul.f32 %v1082, %v1518
    %v1668 = vmul.f32 %v1084, %v1532
    %v1669 = vmul.f32 %v1086, %v1546
    %v1670 = vmul.f32 %v1088, %v1560
    %v1671 = vmul.f32 %v1090, %v1574
    %v1672 = vmul.f32 %v1092, %v1588
    %v1673 = vmul.f32 %v1094, %v1602
    %v1674 = vmul.f32 %v1096, %v1616
    %v1675 = vmul.f32 %v1098, %v1630
    %v1676 = vmul.f32 %v1100, %v1644
    %v1678 = vsel %vm412, %v1645, 0
    %v1681 = vsel %vm412, %v1646, 0
    %1683 = vmatpush.msra.mxu0 0.0
    %1684 = vmatpush.msra.mxu0 0.0
    %1685 = vmatpush.msra.mxu0 0.0
    %1686 = vmatpush.msra.mxu0 0.0
    %1687 = vmatpush.msra.mxu0 0.0
    %1688 = vmatpush.msra.mxu0 0.0
    %1689 = vmatpush.msra.mxu0 0.0
    %1690 = vmatpush.msra.mxu0 0.0
    %1691 = vmatpush.msra.mxu0 0.0
    %1692 = vmatpush.msra.mxu0 0.0
    %1693 = vmatpush.msra.mxu0 0.0
    %1694 = vmatpush.msra.mxu0 0.0
    %1695 = vmatpush.msra.mxu0 0.0
    %1696 = vmatpush.msra.mxu0 0.0
    %1697 = vmatpush.msra.mxu0 %v196
    %1698 = vmatpush.msra.mxu0 %v193
    %1699 = vmatmul.f32.gmra.mxu0 %v1678
    %v1700 = vpop.f32.mrf.mxu0
    %v1701 = vadd.f32 0.0, %v1700
    %1702 = vmatmul.f32.gmra.mxu0 %v1681
    %v1703 = vpop.f32.mrf.mxu0
    %v1704 = vadd.f32 0.0, %v1703
    %1705 = vdwg.mxu0
    %v1707 = vsel %vm412, %v1647, 0
    %v1710 = vsel %vm412, %v1648, 0
    %1712 = vmatpush.msra.mxu0 0.0
    %1713 = vmatpush.msra.mxu0 0.0
    %1714 = vmatpush.msra.mxu0 0.0
    %1715 = vmatpush.msra.mxu0 0.0
    %1716 = vmatpush.msra.mxu0 0.0
    %1717 = vmatpush.msra.mxu0 0.0
    %1718 = vmatpush.msra.mxu0 0.0
    %1719 = vmatpush.msra.mxu0 0.0
    %1720 = vmatpush.msra.mxu0 0.0
    %1721 = vmatpush.msra.mxu0 0.0
    %1722 = vmatpush.msra.mxu0 0.0
    %1723 = vmatpush.msra.mxu0 0.0
    %1724 = vmatpush.msra.mxu0 0.0
    %1725 = vmatpush.msra.mxu0 0.0
    %1726 = vmatpush.msra.mxu0 %v331
    %1727 = vmatpush.msra.mxu0 %v329
    %1728 = vmatmul.f32.gmra.mxu0 %v1707
    %v1729 = vpop.f32.mrf.mxu0
    %v1730 = vadd.f32 0.0, %v1729
    %1731 = vmatmul.f32.gmra.mxu0 %v1710
    %v1732 = vpop.f32.mrf.mxu0
    %v1733 = vadd.f32 0.0, %v1732
    %1734 = vdwg.mxu0
    %v1736 = vsel %vm412, %v1649, 0
    %v1739 = vsel %vm412, %v1650, 0
    %1741 = vmatpush.msra.mxu0 0.0
    %1742 = vmatpush.msra.mxu0 0.0
    %1743 = vmatpush.msra.mxu0 0.0
    %1744 = vmatpush.msra.mxu0 0.0
    %1745 = vmatpush.msra.mxu0 0.0
    %1746 = vmatpush.msra.mxu0 0.0
    %1747 = vmatpush.msra.mxu0 0.0
    %1748 = vmatpush.msra.mxu0 0.0
    %1749 = vmatpush.msra.mxu0 0.0
    %1750 = vmatpush.msra.mxu0 0.0
    %1751 = vmatpush.msra.mxu0 0.0
    %1752 = vmatpush.msra.mxu0 0.0
    %1753 = vmatpush.msra.mxu0 0.0
    %1754 = vmatpush.msra.mxu0 0.0
    %1755 = vmatpush.msra.mxu0 %v343
    %1756 = vmatpush.msra.mxu0 %v341
    %1757 = vmatmul.f32.gmra.mxu0 %v1736
    %v1758 = vpop.f32.mrf.mxu0
    %v1759 = vadd.f32 0.0, %v1758
    %1760 = vmatmul.f32.gmra.mxu0 %v1739
    %v1761 = vpop.f32.mrf.mxu0
    %v1762 = vadd.f32 0.0, %v1761
    %1763 = vdwg.mxu0
    %v1765 = vsel %vm412, %v1651, 0
    %v1768 = vsel %vm412, %v1652, 0
    %1770 = vmatpush.msra.mxu0 0.0
    %1771 = vmatpush.msra.mxu0 0.0
    %1772 = vmatpush.msra.mxu0 0.0
    %1773 = vmatpush.msra.mxu0 0.0
    %1774 = vmatpush.msra.mxu0 0.0
    %1775 = vmatpush.msra.mxu0 0.0
    %1776 = vmatpush.msra.mxu0 0.0
    %1777 = vmatpush.msra.mxu0 0.0
    %1778 = vmatpush.msra.mxu0 0.0
    %1779 = vmatpush.msra.mxu0 0.0
    %1780 = vmatpush.msra.mxu0 0.0
    %1781 = vmatpush.msra.mxu0 0.0
    %1782 = vmatpush.msra.mxu0 0.0
    %1783 = vmatpush.msra.mxu0 0.0
    %1784 = vmatpush.msra.mxu0 %v355
    %1785 = vmatpush.msra.mxu0 %v353
    %1786 = vmatmul.f32.gmra.mxu0 %v1765
    %v1787 = vpop.f32.mrf.mxu0
    %v1788 = vadd.f32 0.0, %v1787
    %1789 = vmatmul.f32.gmra.mxu0 %v1768
    %v1790 = vpop.f32.mrf.mxu0
    %v1791 = vadd.f32 0.0, %v1790
    %1792 = vdwg.mxu0
    %v1794 = vsel %vm412, %v1653, 0
    %v1797 = vsel %vm412, %v1654, 0
    %1799 = vmatpush.msra.mxu0 0.0
    %1800 = vmatpush.msra.mxu0 0.0
    %1801 = vmatpush.msra.mxu0 0.0
    %1802 = vmatpush.msra.mxu0 0.0
    %1803 = vmatpush.msra.mxu0 0.0
    %1804 = vmatpush.msra.mxu0 0.0
    %1805 = vmatpush.msra.mxu0 0.0
    %1806 = vmatpush.msra.mxu0 0.0
    %1807 = vmatpush.msra.mxu0 0.0
    %1808 = vmatpush.msra.mxu0 0.0
    %1809 = vmatpush.msra.mxu0 0.0
    %1810 = vmatpush.msra.mxu0 0.0
    %1811 = vmatpush.msra.mxu0 0.0
    %1812 = vmatpush.msra.mxu0 0.0
    %1813 = vmatpush.msra.mxu0 %v367
    %1814 = vmatpush.msra.mxu0 %v365
    %1815 = vmatmul.f32.gmra.mxu0 %v1794
    %v1816 = vpop.f32.mrf.mxu0
    %v1817 = vadd.f32 0.0, %v1816
    %1818 = vmatmul.f32.gmra.mxu0 %v1797
    %v1819 = vpop.f32.mrf.mxu0
    %v1820 = vadd.f32 0.0, %v1819
    %1821 = vdwg.mxu0
    %v1823 = vsel %vm412, %v1655, 0
    %v1826 = vsel %vm412, %v1656, 0
    %1828 = vmatpush.msra.mxu0 0.0
    %1829 = vmatpush.msra.mxu0 0.0
    %1830 = vmatpush.msra.mxu0 0.0
    %1831 = vmatpush.msra.mxu0 0.0
    %1832 = vmatpush.msra.mxu0 0.0
    %1833 = vmatpush.msra.mxu0 0.0
    %1834 = vmatpush.msra.mxu0 0.0
    %1835 = vmatpush.msra.mxu0 0.0
    %1836 = vmatpush.msra.mxu0 0.0
    %1837 = vmatpush.msra.mxu0 0.0
    %1838 = vmatpush.msra.mxu0 0.0
    %1839 = vmatpush.msra.mxu0 0.0
    %1840 = vmatpush.msra.mxu0 0.0
    %1841 = vmatpush.msra.mxu0 0.0
    %1842 = vmatpush.msra.mxu0 %v379
    %1843 = vmatpush.msra.mxu0 %v377
    %1844 = vmatmul.f32.gmra.mxu0 %v1823
    %v1845 = vpop.f32.mrf.mxu0
    %v1846 = vadd.f32 0.0, %v1845
    %1847 = vmatmul.f32.gmra.mxu0 %v1826
    %v1848 = vpop.f32.mrf.mxu0
    %v1849 = vadd.f32 0.0, %v1848
    %1850 = vdwg.mxu0
    %v1852 = vsel %vm412, %v1657, 0
    %v1855 = vsel %vm412, %v1658, 0
    %1857 = vmatpush.msra.mxu0 0.0
    %1858 = vmatpush.msra.mxu0 0.0
    %1859 = vmatpush.msra.mxu0 0.0
    %1860 = vmatpush.msra.mxu0 0.0
    %1861 = vmatpush.msra.mxu0 0.0
    %1862 = vmatpush.msra.mxu0 0.0
    %1863 = vmatpush.msra.mxu0 0.0
    %1864 = vmatpush.msra.mxu0 0.0
    %1865 = vmatpush.msra.mxu0 0.0
    %1866 = vmatpush.msra.mxu0 0.0
    %1867 = vmatpush.msra.mxu0 0.0
    %1868 = vmatpush.msra.mxu0 0.0
    %1869 = vmatpush.msra.mxu0 0.0
    %1870 = vmatpush.msra.mxu0 0.0
    %1871 = vmatpush.msra.mxu0 %v391
    %1872 = vmatpush.msra.mxu0 %v389
    %1873 = vmatmul.f32.gmra.mxu0 %v1852
    %v1874 = vpop.f32.mrf.mxu0
    %v1875 = vadd.f32 0.0, %v1874
    %1876 = vmatmul.f32.gmra.mxu0 %v1855
    %v1877 = vpop.f32.mrf.mxu0
    %v1878 = vadd.f32 0.0, %v1877
    %1879 = vdwg.mxu0
    %v1881 = vsel %vm412, %v1659, 0
    %v1884 = vsel %vm412, %v1660, 0
    %1886 = vmatpush.msra.mxu0 0.0
    %1887 = vmatpush.msra.mxu0 0.0
    %1888 = vmatpush.msra.mxu0 0.0
    %1889 = vmatpush.msra.mxu0 0.0
    %1890 = vmatpush.msra.mxu0 0.0
    %1891 = vmatpush.msra.mxu0 0.0
    %1892 = vmatpush.msra.mxu0 0.0
    %1893 = vmatpush.msra.mxu0 0.0
    %1894 = vmatpush.msra.mxu0 0.0
    %1895 = vmatpush.msra.mxu0 0.0
    %1896 = vmatpush.msra.mxu0 0.0
    %1897 = vmatpush.msra.mxu0 0.0
    %1898 = vmatpush.msra.mxu0 0.0
    %1899 = vmatpush.msra.mxu0 0.0
    %1900 = vmatpush.msra.mxu0 %v403
    %1901 = vmatpush.msra.mxu0 %v401
    %1902 = vmatmul.f32.gmra.mxu0 %v1881
    %v1903 = vpop.f32.mrf.mxu0
    %v1904 = vadd.f32 0.0, %v1903
    %1905 = vmatmul.f32.gmra.mxu0 %v1884
    %v1906 = vpop.f32.mrf.mxu0
    %v1907 = vadd.f32 0.0, %v1906
    %1908 = vdwg.mxu0
    %v1910 = vsel %vm412, %v1661, 0
    %v1913 = vsel %vm412, %v1662, 0
    %1915 = vmatpush.msra.mxu0 0.0
    %1916 = vmatpush.msra.mxu0 0.0
    %1917 = vmatpush.msra.mxu0 0.0
    %1918 = vmatpush.msra.mxu0 0.0
    %1919 = vmatpush.msra.mxu0 0.0
    %1920 = vmatpush.msra.mxu0 0.0
    %1921 = vmatpush.msra.mxu0 0.0
    %1922 = vmatpush.msra.mxu0 0.0
    %1923 = vmatpush.msra.mxu0 0.0
    %1924 = vmatpush.msra.mxu0 0.0
    %1925 = vmatpush.msra.mxu0 0.0
    %1926 = vmatpush.msra.mxu0 0.0
    %1927 = vmatpush.msra.mxu0 0.0
    %1928 = vmatpush.msra.mxu0 0.0
    %1929 = vmatpush.msra.mxu0 %v202
    %1930 = vmatpush.msra.mxu0 %v199
    %1931 = vmatmul.f32.gmra.mxu0 %v1910
    %v1932 = vpop.f32.mrf.mxu0
    %v1933 = vadd.f32 0.0, %v1932
    %1934 = vmatmul.f32.gmra.mxu0 %v1913
    %v1935 = vpop.f32.mrf.mxu0
    %v1936 = vadd.f32 0.0, %v1935
    %1937 = vdwg.mxu0
    %v1939 = vsel %vm412, %v1663, 0
    %v1942 = vsel %vm412, %v1664, 0
    %1944 = vmatpush.msra.mxu0 0.0
    %1945 = vmatpush.msra.mxu0 0.0
    %1946 = vmatpush.msra.mxu0 0.0
    %1947 = vmatpush.msra.mxu0 0.0
    %1948 = vmatpush.msra.mxu0 0.0
    %1949 = vmatpush.msra.mxu0 0.0
    %1950 = vmatpush.msra.mxu0 0.0
    %1951 = vmatpush.msra.mxu0 0.0
    %1952 = vmatpush.msra.mxu0 0.0
    %1953 = vmatpush.msra.mxu0 0.0
    %1954 = vmatpush.msra.mxu0 0.0
    %1955 = vmatpush.msra.mxu0 0.0
    %1956 = vmatpush.msra.mxu0 0.0
    %1957 = vmatpush.msra.mxu0 0.0
    %1958 = vmatpush.msra.mxu0 %v335
    %1959 = vmatpush.msra.mxu0 %v333
    %1960 = vmatmul.f32.gmra.mxu0 %v1939
    %v1961 = vpop.f32.mrf.mxu0
    %v1962 = vadd.f32 0.0, %v1961
    %1963 = vmatmul.f32.gmra.mxu0 %v1942
    %v1964 = vpop.f32.mrf.mxu0
    %v1965 = vadd.f32 0.0, %v1964
    %1966 = vdwg.mxu0
    %v1968 = vsel %vm412, %v1665, 0
    %v1971 = vsel %vm412, %v1666, 0
    %1973 = vmatpush.msra.mxu0 0.0
    %1974 = vmatpush.msra.mxu0 0.0
    %1975 = vmatpush.msra.mxu0 0.0
    %1976 = vmatpush.msra.mxu0 0.0
    %1977 = vmatpush.msra.mxu0 0.0
    %1978 = vmatpush.msra.mxu0 0.0
    %1979 = vmatpush.msra.mxu0 0.0
    %1980 = vmatpush.msra.mxu0 0.0
    %1981 = vmatpush.msra.mxu0 0.0
    %1982 = vmatpush.msra.mxu0 0.0
    %1983 = vmatpush.msra.mxu0 0.0
    %1984 = vmatpush.msra.mxu0 0.0
    %1985 = vmatpush.msra.mxu0 0.0
    %1986 = vmatpush.msra.mxu0 0.0
    %1987 = vmatpush.msra.mxu0 %v347
    %1988 = vmatpush.msra.mxu0 %v345
    %1989 = vmatmul.f32.gmra.mxu0 %v1968
    %v1990 = vpop.f32.mrf.mxu0
    %v1991 = vadd.f32 0.0, %v1990
    %1992 = vmatmul.f32.gmra.mxu0 %v1971
    %v1993 = vpop.f32.mrf.mxu0
    %v1994 = vadd.f32 0.0, %v1993
    %1995 = vdwg.mxu0
    %v1997 = vsel %vm412, %v1667, 0
    %v2000 = vsel %vm412, %v1668, 0
    %2002 = vmatpush.msra.mxu0 0.0
    %2003 = vmatpush.msra.mxu0 0.0
    %2004 = vmatpush.msra.mxu0 0.0
    %2005 = vmatpush.msra.mxu0 0.0
    %2006 = vmatpush.msra.mxu0 0.0
    %2007 = vmatpush.msra.mxu0 0.0
    %2008 = vmatpush.msra.mxu0 0.0
    %2009 = vmatpush.msra.mxu0 0.0
    %2010 = vmatpush.msra.mxu0 0.0
    %2011 = vmatpush.msra.mxu0 0.0
    %2012 = vmatpush.msra.mxu0 0.0
    %2013 = vmatpush.msra.mxu0 0.0
    %2014 = vmatpush.msra.mxu0 0.0
    %2015 = vmatpush.msra.mxu0 0.0
    %2016 = vmatpush.msra.mxu0 %v359
    %2017 = vmatpush.msra.mxu0 %v357
    %2018 = vmatmul.f32.gmra.mxu0 %v1997
    %v2019 = vpop.f32.mrf.mxu0
    %v2020 = vadd.f32 0.0, %v2019
    %2021 = vmatmul.f32.gmra.mxu0 %v2000
    %v2022 = vpop.f32.mrf.mxu0
    %v2023 = vadd.f32 0.0, %v2022
    %2024 = vdwg.mxu0
    %v2026 = vsel %vm412, %v1669, 0
    %v2029 = vsel %vm412, %v1670, 0
    %2031 = vmatpush.msra.mxu0 0.0
    %2032 = vmatpush.msra.mxu0 0.0
    %2033 = vmatpush.msra.mxu0 0.0
    %2034 = vmatpush.msra.mxu0 0.0
    %2035 = vmatpush.msra.mxu0 0.0
    %2036 = vmatpush.msra.mxu0 0.0
    %2037 = vmatpush.msra.mxu0 0.0
    %2038 = vmatpush.msra.mxu0 0.0
    %2039 = vmatpush.msra.mxu0 0.0
    %2040 = vmatpush.msra.mxu0 0.0
    %2041 = vmatpush.msra.mxu0 0.0
    %2042 = vmatpush.msra.mxu0 0.0
    %2043 = vmatpush.msra.mxu0 0.0
    %2044 = vmatpush.msra.mxu0 0.0
    %2045 = vmatpush.msra.mxu0 %v371
    %2046 = vmatpush.msra.mxu0 %v369
    %2047 = vmatmul.f32.gmra.mxu0 %v2026
    %v2048 = vpop.f32.mrf.mxu0
    %v2049 = vadd.f32 0.0, %v2048
    %2050 = vmatmul.f32.gmra.mxu0 %v2029
    %v2051 = vpop.f32.mrf.mxu0
    %v2052 = vadd.f32 0.0, %v2051
    %2053 = vdwg.mxu0
    %v2055 = vsel %vm412, %v1671, 0
    %v2058 = vsel %vm412, %v1672, 0
    %2060 = vmatpush.msra.mxu0 0.0
    %2061 = vmatpush.msra.mxu0 0.0
    %2062 = vmatpush.msra.mxu0 0.0
    %2063 = vmatpush.msra.mxu0 0.0
    %2064 = vmatpush.msra.mxu0 0.0
    %2065 = vmatpush.msra.mxu0 0.0
    %2066 = vmatpush.msra.mxu0 0.0
    %2067 = vmatpush.msra.mxu0 0.0
    %2068 = vmatpush.msra.mxu0 0.0
    %2069 = vmatpush.msra.mxu0 0.0
    %2070 = vmatpush.msra.mxu0 0.0
    %2071 = vmatpush.msra.mxu0 0.0
    %2072 = vmatpush.msra.mxu0 0.0
    %2073 = vmatpush.msra.mxu0 0.0
    %2074 = vmatpush.msra.mxu0 %v383
    %2075 = vmatpush.msra.mxu0 %v381
    %2076 = vmatmul.f32.gmra.mxu0 %v2055
    %v2077 = vpop.f32.mrf.mxu0
    %v2078 = vadd.f32 0.0, %v2077
    %2079 = vmatmul.f32.gmra.mxu0 %v2058
    %v2080 = vpop.f32.mrf.mxu0
    %v2081 = vadd.f32 0.0, %v2080
    %2082 = vdwg.mxu0
    %v2084 = vsel %vm412, %v1673, 0
    %v2087 = vsel %vm412, %v1674, 0
    %2089 = vmatpush.msra.mxu0 0.0
    %2090 = vmatpush.msra.mxu0 0.0
    %2091 = vmatpush.msra.mxu0 0.0
    %2092 = vmatpush.msra.mxu0 0.0
    %2093 = vmatpush.msra.mxu0 0.0
    %2094 = vmatpush.msra.mxu0 0.0
    %2095 = vmatpush.msra.mxu0 0.0
    %2096 = vmatpush.msra.mxu0 0.0
    %2097 = vmatpush.msra.mxu0 0.0
    %2098 = vmatpush.msra.mxu0 0.0
    %2099 = vmatpush.msra.mxu0 0.0
    %2100 = vmatpush.msra.mxu0 0.0
    %2101 = vmatpush.msra.mxu0 0.0
    %2102 = vmatpush.msra.mxu0 0.0
    %2103 = vmatpush.msra.mxu0 %v395
    %2104 = vmatpush.msra.mxu0 %v393
    %2105 = vmatmul.f32.gmra.mxu0 %v2084
    %v2106 = vpop.f32.mrf.mxu0
    %v2107 = vadd.f32 0.0, %v2106
    %2108 = vmatmul.f32.gmra.mxu0 %v2087
    %v2109 = vpop.f32.mrf.mxu0
    %v2110 = vadd.f32 0.0, %v2109
    %2111 = vdwg.mxu0
    %v2113 = vsel %vm412, %v1675, 0
    %v2116 = vsel %vm412, %v1676, 0
    %2118 = vmatpush.msra.mxu0 0.0
    %2119 = vmatpush.msra.mxu0 0.0
    %2120 = vmatpush.msra.mxu0 0.0
    %2121 = vmatpush.msra.mxu0 0.0
    %2122 = vmatpush.msra.mxu0 0.0
    %2123 = vmatpush.msra.mxu0 0.0
    %2124 = vmatpush.msra.mxu0 0.0
    %2125 = vmatpush.msra.mxu0 0.0
    %2126 = vmatpush.msra.mxu0 0.0
    %2127 = vmatpush.msra.mxu0 0.0
    %2128 = vmatpush.msra.mxu0 0.0
    %2129 = vmatpush.msra.mxu0 0.0
    %2130 = vmatpush.msra.mxu0 0.0
    %2131 = vmatpush.msra.mxu0 0.0
    %2132 = vmatpush.msra.mxu0 %v407
    %2133 = vmatpush.msra.mxu0 %v405
    %2134 = vmatmul.f32.gmra.mxu0 %v2113
    %v2135 = vpop.f32.mrf.mxu0
    %v2136 = vadd.f32 0.0, %v2135
    %2137 = vmatmul.f32.gmra.mxu0 %v2116
    %v2138 = vpop.f32.mrf.mxu0
    %v2139 = vadd.f32 0.0, %v2138
    %2140 = vdwg.mxu0
    %2145 = vrot.lane.b32.xlu0 %v1730, 16
    %v2146 = vpop.permute.xlu0 %2145
    %2147 = vrot.lane.b32.xlu0 %v1733, 16
    %v2148 = vpop.permute.xlu0 %2147
    %2149 = vrot.lane.b32.xlu0 %v1962, 16
    %v2150 = vpop.permute.xlu0 %2149
    %2151 = vrot.lane.b32.xlu0 %v1965, 16
    %v2152 = vpop.permute.xlu0 %2151
    %2161 = vrot.lane.b32.xlu0 %v1759, 32
    %v2162 = vpop.permute.xlu0 %2161
    %2163 = vrot.lane.b32.xlu0 %v1762, 32
    %v2164 = vpop.permute.xlu0 %2163
    %2165 = vrot.lane.b32.xlu0 %v1991, 32
    %v2166 = vpop.permute.xlu0 %2165
    %2167 = vrot.lane.b32.xlu0 %v1994, 32
    %v2168 = vpop.permute.xlu0 %2167
    %2177 = vrot.lane.b32.xlu0 %v1788, 48
    %v2178 = vpop.permute.xlu0 %2177
    %2179 = vrot.lane.b32.xlu0 %v1791, 48
    %v2180 = vpop.permute.xlu0 %2179
    %2181 = vrot.lane.b32.xlu0 %v2020, 48
    %v2182 = vpop.permute.xlu0 %2181
    %2183 = vrot.lane.b32.xlu0 %v2023, 48
    %v2184 = vpop.permute.xlu0 %2183
    %2193 = vrot.lane.b32.xlu0 %v1817, 64
    %v2194 = vpop.permute.xlu0 %2193
    %2195 = vrot.lane.b32.xlu0 %v1820, 64
    %v2196 = vpop.permute.xlu0 %2195
    %2197 = vrot.lane.b32.xlu0 %v2049, 64
    %v2198 = vpop.permute.xlu0 %2197
    %2199 = vrot.lane.b32.xlu0 %v2052, 64
    %v2200 = vpop.permute.xlu0 %2199
    %2209 = vrot.lane.b32.xlu0 %v1846, 80
    %v2210 = vpop.permute.xlu0 %2209
    %2211 = vrot.lane.b32.xlu0 %v1849, 80
    %v2212 = vpop.permute.xlu0 %2211
    %2213 = vrot.lane.b32.xlu0 %v2078, 80
    %v2214 = vpop.permute.xlu0 %2213
    %2215 = vrot.lane.b32.xlu0 %v2081, 80
    %v2216 = vpop.permute.xlu0 %2215
    %2225 = vrot.lane.b32.xlu0 %v1875, 96
    %v2226 = vpop.permute.xlu0 %2225
    %2227 = vrot.lane.b32.xlu0 %v1878, 96
    %v2228 = vpop.permute.xlu0 %2227
    %2229 = vrot.lane.b32.xlu0 %v2107, 96
    %v2230 = vpop.permute.xlu0 %2229
    %2231 = vrot.lane.b32.xlu0 %v2110, 96
    %v2232 = vpop.permute.xlu0 %2231
    %2241 = vrot.lane.b32.xlu0 %v1904, 112
    %v2242 = vpop.permute.xlu0 %2241
    %2243 = vrot.lane.b32.xlu0 %v1907, 112
    %v2244 = vpop.permute.xlu0 %2243
    %2245 = vrot.lane.b32.xlu0 %v2136, 112
    %v2246 = vpop.permute.xlu0 %2245
    %2247 = vrot.lane.b32.xlu0 %v2139, 112
    %v2248 = vpop.permute.xlu0 %2247
    %v2253 = vsel %vm412, %v1701, %v2146
    %v2254 = vsel %vm412, %v1704, %v2148
    %v2255 = vsel %vm412, %v1933, %v2150
    %v2256 = vsel %vm412, %v1936, %v2152
    %vm2257 = vcmask 261120
    %v2258 = vsel %vm2257, %v2253, %v2162
    %v2259 = vsel %vm2257, %v2254, %v2164
    %v2260 = vsel %vm2257, %v2255, %v2166
    %v2261 = vsel %vm2257, %v2256, %v2168
    %vm2262 = vcmask 392192
    %v2263 = vsel %vm2262, %v2258, %v2178
    %v2264 = vsel %vm2262, %v2259, %v2180
    %v2265 = vsel %vm2262, %v2260, %v2182
    %v2266 = vsel %vm2262, %v2261, %v2184
    %vm2267 = vcmask 523264
    %v2268 = vsel %vm2267, %v2263, %v2194
    %v2269 = vsel %vm2267, %v2264, %v2196
    %v2270 = vsel %vm2267, %v2265, %v2198
    %v2271 = vsel %vm2267, %v2266, %v2200
    %vm2272 = vcmask 654336
    %v2273 = vsel %vm2272, %v2268, %v2210
    %v2274 = vsel %vm2272, %v2269, %v2212
    %v2275 = vsel %vm2272, %v2270, %v2214
    %v2276 = vsel %vm2272, %v2271, %v2216
    %vm2277 = vcmask 785408
    %v2278 = vsel %vm2277, %v2273, %v2226
    %v2279 = vsel %vm2277, %v2274, %v2228
    %v2280 = vsel %vm2277, %v2275, %v2230
    %v2281 = vsel %vm2277, %v2276, %v2232
    %vm2282 = vcmask 916480
    %v2283 = vsel %vm2282, %v2278, %v2242
    %v2284 = vsel %vm2282, %v2279, %v2244
    %v2285 = vsel %vm2282, %v2280, %v2246
    %v2286 = vsel %vm2282, %v2281, %v2248
    %v2287 = vld [vmem:[#allocation7] sm:$0xff]
    %v2288 = vld [vmem:[#allocation7 + $0x8] sm:$0xff]
    %v2289 = vld [vmem:[#allocation7 + $0x10] sm:$0xff]
    %v2290 = vld [vmem:[#allocation7 + $0x18] sm:$0xff]
    %v2291 = vld [vmem:[#allocation7 + $0x20] sm:$0xff]
    %v2292 = vld [vmem:[#allocation7 + $0x28] sm:$0xff]
    %v2293 = vld [vmem:[#allocation7 + $0x30] sm:$0xff]
    %v2294 = vld [vmem:[#allocation7 + $0x38] sm:$0xff]
    %v2295 = vld [vmem:[#allocation7 + $0x40] sm:$0xff]
    %v2296 = vld [vmem:[#allocation7 + $0x48] sm:$0xff]
    %v2297 = vld [vmem:[#allocation7 + $0x50] sm:$0xff]
    %v2298 = vld [vmem:[#allocation7 + $0x58] sm:$0xff]
    %v2299 = vld [vmem:[#allocation7 + $0x60] sm:$0xff]
    %v2300 = vld [vmem:[#allocation7 + $0x68] sm:$0xff]
    %v2301 = vld [vmem:[#allocation7 + $0x70] sm:$0xff]
    %v2302 = vld [vmem:[#allocation7 + $0x78] sm:$0xff]
    %v2303 = vld [vmem:[%s3] sm:$0x1]
    %v2305 = vperm.slane %v2303, 0
    %2307 = vmatpush.msra.mxu0 %v2302
    %2308 = vmatpush.msra.mxu0 %v2301
    %2309 = vmatpush.msra.mxu0 %v2300
    %2310 = vmatpush.msra.mxu0 %v2299
    %2311 = vmatpush.msra.mxu0 %v2298
    %2312 = vmatpush.msra.mxu0 %v2297
    %2313 = vmatpush.msra.mxu0 %v2296
    %2314 = vmatpush.msra.mxu0 %v2295
    %2315 = vmatpush.msra.mxu0 %v2294
    %2316 = vmatpush.msra.mxu0 %v2293
    %2317 = vmatpush.msra.mxu0 %v2292
    %2318 = vmatpush.msra.mxu0 %v2291
    %2319 = vmatpush.msra.mxu0 %v2290
    %2320 = vmatpush.msra.mxu0 %v2289
    %2321 = vmatpush.msra.mxu0 %v2288
    %2322 = vmatpush.msra.mxu0 %v2287
    %2323 = vmatmul.f32.gmra.mxu0 %v2283
    %v2324 = vpop.f32.mrf.mxu0
    %v2325 = vadd.f32 %v2305, %v2324
    %2326 = vmatmul.f32.gmra.mxu0 %v2284
    %v2327 = vpop.f32.mrf.mxu0
    %v2328 = vadd.f32 %v2305, %v2327
    %2329 = vmatmul.f32.gmra.mxu0 %v2285
    %v2330 = vpop.f32.mrf.mxu0
    %v2331 = vadd.f32 %v2305, %v2330
    %2332 = vmatmul.f32.gmra.mxu0 %v2286
    %v2333 = vpop.f32.mrf.mxu0
    %v2334 = vadd.f32 %v2305, %v2333
    %2335 = vdwg.mxu0
    %2336 = vst [vmem:[#allocation8] sm:$0xff] %v2325
    %2337 = vst [vmem:[#allocation8 + $0x8] sm:$0xff] %v2328
    %2338 = vst [vmem:[#allocation8 + $0x10] sm:$0xff] %v2331
    %2339 = vst [vmem:[#allocation8 + $0x18] sm:$0xff] %v2334
    // Predicated region
    $region30: #{tpu_custom_call.1} parent=1 // pred_check
      _
    $region31: #{tpu_custom_call.1} parent=1 // pred_check_branch
      %2341 = sbr.rel (0) target = $region33
    $region32: #{tpu_custom_call.1} parent=1 // pred_region
      %2343 = vsyncadd [#allocation4], 0
      %s2344 = sshll.u32 [#allocation8], 4
      %s2345 = int_to_ptr.vmem [resolvable:$true] %s2344
      %s2346 = sshll.u32 %s4, 4
      %s2347 = int_to_ptr.hbm [resolvable:$true] %s2346
      %2352 = dma.vmem_to_hbm [thread:$0]  %s2345, 512, %s2347, [#allocation4], 128, 128, 8
    $region33: #{tpu_custom_call.1} parent=1 // pred_fallthru
      _
    // Predicated region
    $region34: #{tpu_custom_call.1} parent=1 // pred_check
      _
    $region35: #{tpu_custom_call.1} parent=1 // pred_check_branch
      %2354 = sbr.rel (0) target = $region37
    $region36: #{tpu_custom_call.1} parent=1 // pred_region
      %2356 = dma.done [#allocation4], 512
    $region37: #{tpu_custom_call.1} parent=1 // pred_fallthru
      _
    %2357 = vsyncpa [#allocation3], 1
    %2358 = vsyncpa [#allocation6], 1
    %2359 = vsyncpa [#allocation4], 1

</llo_original>
